<compile_context>
chip_gen: v5e
topology: v5e:2x2
jax: 0.10.0
libtpu: 0.0.40
codegen_flags: <defaults>
</compile_context>

<pallas_src>
import functools

import jax
import jax.numpy as jnp
from jax.experimental import pallas as pl
from jax.experimental.pallas import tpu as pltpu

INPUT_SIZE = 2
HIDDEN_SIZE = 10
LATENT_SIZE = 2


def _vae_kernel(act_ref, w_ref, out_ref, *, T, B, I, H, L):
    f32 = jnp.float32

    # ---------------- one-time unpack (all static slices) -----------------
    w = w_ref[...]                                   # (3H+2I+L+4, >=H)
    r = 0
    e_whh  = w[r:r + H, 0:H];        r += H          # encoder W_hh   (in, out)
    e_wih  = w[r:r + I, 0:H];        r += I          # encoder W_ih^T (I, H)
    dfc_w  = w[r:r + L, 0:H];        r += L          # decoder fc W^T (L, H)
    e_b    = w[r:r + 1, 0:H];        r += 1          # encoder b_ih + b_hh
    dfc_b  = w[r:r + 1, 0:H];        r += 1          # decoder fc bias
    head_w = w[r:r + H, 0:2 * L];    r += H          # [mu_w | lv_w]  (H, 2L)
    head_b = w[r:r + 1, 0:2 * L];    r += 1          # [mu_b | lv_b]  (1, 2L)
    d_wih  = w[r:r + H, 0:I];        r += H          # decoder W_ih^T (H, I)
    d_b    = w[r:r + 1, 0:I];        r += 1          # decoder b_ih + b_hh
    d_whh_rows = [w[r + k:r + k + 1, 0:I] for k in range(I)]   # I x (1, I)

    # Encoder W_hh rows, hoisted once: lane-resident FMA operands for the loop.
    e_whh_rows = [e_whh[k:k + 1, :] for k in range(H)]          # H x (1, H)

    act = act_ref[...]                               # (T*B + B, max(I, L))
    x   = act[0:T * B, 0:I]                          # (T*B, I) time-major
    eps = act[T * B:T * B + B, 0:L]                  # (B, L)

    # ------ Encoder: input projection hoisted out of the recurrence -------
    xw = jnp.dot(x, e_wih, preferred_element_type=f32) + e_b    # (T*B, H)

    # Serial recurrence stays OFF the MXU: per step = H broadcast-FMAs (VPU)
    # + one tanh (EUP); no MXU round-trip latency on the dependent chain.
    h = jnp.zeros((B, H), f32)
    for t in range(T):                               # static unroll (T small)
        acc = xw[t * B:(t + 1) * B, :]
        for k in range(H):
            acc = acc + h[:, k:k + 1] * e_whh_rows[k]
        h = jnp.tanh(acc)

    # ------ Heads: one fused matmul gives [mu | logvar] --------------------
    head = jnp.dot(h, head_w, preferred_element_type=f32) + head_b   # (B, 2L)
    mu = head[:, 0:L]
    logvar = head[:, L:2 * L]

    # ------ Reparameterization (eps supplied by the host) ------------------
    z = mu + eps * jnp.exp(0.5 * logvar)                              # (B, L)

    # ------ Decoder: constant per-step input, projected once ---------------
    dec_in = jnp.dot(z, dfc_w, preferred_element_type=f32) + dfc_b    # (B, H)
    proj = jnp.dot(dec_in, d_wih, preferred_element_type=f32) + d_b   # (B, I)

    # Decoder recurrence: ONE fused (B, I) state; per step = I broadcast-FMAs
    # + a single tanh on the fused vreg.  Outputs collected as T width-I
    # pieces (not T*I single-lane columns) to keep the epilogue short.
    hd = jnp.zeros((B, I), f32)
    pieces = []
    for _ in range(T):                               # static unroll
        acc = proj
        for k in range(I):
            acc = acc + hd[:, k:k + 1] * d_whh_rows[k]
        hd = jnp.tanh(acc)
        pieces.append(hd)

    # ---- single lane-dense store: [x_recon (T*I) | mu (L) | logvar (L)] ----
    out_ref[...] = jnp.concatenate(pieces + [head], axis=1)


def pack_params(p):
    """Pack all 14 small parameter tensors into ONE static VMEM slab (done once)."""
    H = p["e_whh"].shape[0]
    I = p["e_wih"].shape[0]
    L = p["dfc_w"].shape[0]
    Wd = max(H, 2 * L, I)

    def padw(a):
        return jnp.pad(a, ((0, 0), (0, Wd - a.shape[1])))

    return jnp.concatenate(
        [
            padw(p["e_whh"]),                                        # H rows
            padw(p["e_wih"]),                                        # I rows
            padw(p["dfc_w"]),                                        # L rows
            padw(p["e_b"]),                                          # 1 row
            padw(p["dfc_b"]),                                        # 1 row
            padw(jnp.concatenate([p["mu_w"], p["lv_w"]], axis=1)),   # H rows
            padw(jnp.concatenate([p["mu_b"], p["lv_b"]], axis=1)),   # 1 row
            padw(p["d_wih"]),                                        # H rows
            padw(p["d_b"]),                                          # 1 row
            padw(p["d_whh"]),                                        # I rows
        ],
        axis=0,
    ).astype(jnp.float32)                                            # (3H+2I+L+4, Wd)


def vae_forward(x, eps, param_slab):
    B, T, I = x.shape
    L = eps.shape[1]
    H = HIDDEN_SIZE

    # Time-major layout so the encoder input projection is a single matmul.
    # (At real batch sizes, store x time-major upstream to avoid this copy.)
    x_tb = jnp.transpose(x, (1, 0, 2)).reshape(T * B, I)

    # Pack the two per-call activations into ONE slab -> one input DMA.
    Wa = max(I, L)
    act = jnp.concatenate(
        [jnp.pad(x_tb, ((0, 0), (0, Wa - I))),
         jnp.pad(eps, ((0, 0), (0, Wa - L)))],
        axis=0,
    ).astype(jnp.float32)                                            # (T*B + B, Wa)

    vmem = pl.BlockSpec(memory_space=pltpu.MemorySpace.VMEM)
    kernel = functools.partial(_vae_kernel, T=T, B=B, I=I, H=H, L=L)

    out_slab = pl.pallas_call(
        kernel,
        out_shape=jax.ShapeDtypeStruct((B, T * I + 2 * L), jnp.float32),
        in_specs=[vmem, vmem],
        out_specs=vmem,
    )(act, param_slab)

    x_recon = out_slab[:, : T * I].reshape(B, T, I)
    mu = out_slab[:, T * I : T * I + L]
    logvar = out_slab[:, T * I + L :]
    return x_recon, mu, logvar


def init_params(key, input_size, hidden_size, latent_size):
    """Deterministic PyTorch-style uniform init (weights pre-transposed to (in, out))."""
    I, H, L = input_size, hidden_size, latent_size
    ks = jax.random.split(key, 14)

    def u(k, shape, fan):
        bound = 1.0 / float(fan) ** 0.5
        return jax.random.uniform(k, shape, jnp.float32, -bound, bound)

    return dict(
        # Encoder RNN(input=I, hidden=H): h_t = tanh(x W_ih^T + b_ih + h W_hh^T + b_hh)
        e_wih=u(ks[0], (I, H), H),
        e_whh=u(ks[1], (H, H), H),
        e_b=u(ks[2], (1, H), H) + u(ks[3], (1, H), H),
        # fc_mu / fc_logvar: Linear(H, L)
        mu_w=u(ks[4], (H, L), H),
        mu_b=u(ks[5], (1, L), H),
        lv_w=u(ks[6], (H, L), H),
        lv_b=u(ks[7], (1, L), H),
        # Decoder fc: Linear(L, H)
        dfc_w=u(ks[8], (L, H), L),
        dfc_b=u(ks[9], (1, H), L),
        # Decoder RNN(input=H, hidden=I)
        d_wih=u(ks[10], (H, I), I),
        d_whh=u(ks[11], (I, I), I),
        d_b=u(ks[12], (1, I), I) + u(ks[13], (1, I), I),
    )


def ref_forward(x, eps, p):
    """Pure-JAX reference of the same forward pass (sanity check)."""
    B, T, I = x.shape
    H = p["e_whh"].shape[0]
    h = jnp.zeros((B, H), jnp.float32)
    for t in range(T):
        h = jnp.tanh(x[:, t, :] @ p["e_wih"] + h @ p["e_whh"] + p["e_b"])
    mu = h @ p["mu_w"] + p["mu_b"]
    lv = h @ p["lv_w"] + p["lv_b"]
    z = mu + eps * jnp.exp(0.5 * lv)
    dec_in = z @ p["dfc_w"] + p["dfc_b"]
    proj = dec_in @ p["d_wih"] + p["d_b"]
    hd = jnp.zeros((B, I), jnp.float32)
    outs = []
    for t in range(T):
        hd = jnp.tanh(proj + jnp.dot(hd, p["d_whh"],
                                     precision=jax.lax.Precision.HIGHEST))
        outs.append(hd)
    return jnp.stack(outs, axis=1), mu, lv


if __name__ == "__main__":
    key = jax.random.PRNGKey(0)
    k_param, k_x, k_eps = jax.random.split(key, 3)

    B, T = 2, 8
    params = init_params(k_param, INPUT_SIZE, HIDDEN_SIZE, LATENT_SIZE)
    param_slab = pack_params(params)

    x = jax.random.normal(k_x, (B, T, INPUT_SIZE), jnp.float32)
    # torch.randn_like(std): reparameterization noise, generated deterministically here
    eps = jax.random.normal(k_eps, (B, LATENT_SIZE), jnp.float32)

    fwd = jax.jit(vae_forward)
    x_recon, mu, logvar = jax.block_until_ready(fwd(x, eps, param_slab))

    # sanity check vs pure-JAX reference
    r_recon, r_mu, r_lv = ref_forward(x, eps, params)
    assert jnp.allclose(x_recon, r_recon, atol=1e-4, rtol=1e-4)
    assert jnp.allclose(mu, r_mu, atol=1e-4, rtol=1e-4)
    assert jnp.allclose(logvar, r_lv, atol=1e-4, rtol=1e-4)

    print("KERNEL_OK")
</pallas_src>

<mosaic_0001>
module attributes {stable_mosaic.version = 11 : i64} {
  func.func @_vae_kernel(%arg0: memref<18x2xf32, #tpu.memory_space<vmem>>, %arg1: memref<40x10xf32, #tpu.memory_space<vmem>>, %arg2: memref<2x20xf32, #tpu.memory_space<vmem>>) attributes {dimension_semantics = [], scalar_prefetch = 0 : i64, scratch_operands = 0 : i64, tpu.core_type = #tpu.core_type<tc>} {
    %c0 = arith.constant 0 : index
    %c0_0 = arith.constant 0 : index
    %0 = vector.load %arg1[%c0, %c0_0] : memref<40x10xf32, #tpu.memory_space<vmem>>, vector<40x10xf32>
    %1 = vector.extract_strided_slice %0 {offsets = [0, 0], sizes = [10, 10], strides = [1, 1]} : vector<40x10xf32> to vector<10x10xf32>
    %2 = vector.extract_strided_slice %0 {offsets = [10, 0], sizes = [2, 10], strides = [1, 1]} : vector<40x10xf32> to vector<2x10xf32>
    %3 = vector.extract_strided_slice %0 {offsets = [12, 0], sizes = [2, 10], strides = [1, 1]} : vector<40x10xf32> to vector<2x10xf32>
    %4 = vector.extract_strided_slice %0 {offsets = [14, 0], sizes = [1, 10], strides = [1, 1]} : vector<40x10xf32> to vector<1x10xf32>
    %5 = vector.extract_strided_slice %0 {offsets = [15, 0], sizes = [1, 10], strides = [1, 1]} : vector<40x10xf32> to vector<1x10xf32>
    %6 = vector.extract_strided_slice %0 {offsets = [16, 0], sizes = [10, 4], strides = [1, 1]} : vector<40x10xf32> to vector<10x4xf32>
    %7 = vector.extract_strided_slice %0 {offsets = [26, 0], sizes = [1, 4], strides = [1, 1]} : vector<40x10xf32> to vector<1x4xf32>
    %8 = vector.extract_strided_slice %0 {offsets = [27, 0], sizes = [10, 2], strides = [1, 1]} : vector<40x10xf32> to vector<10x2xf32>
    %9 = vector.extract_strided_slice %0 {offsets = [37, 0], sizes = [1, 2], strides = [1, 1]} : vector<40x10xf32> to vector<1x2xf32>
    %10 = vector.extract_strided_slice %0 {offsets = [38, 0], sizes = [1, 2], strides = [1, 1]} : vector<40x10xf32> to vector<1x2xf32>
    %11 = vector.extract_strided_slice %0 {offsets = [39, 0], sizes = [1, 2], strides = [1, 1]} : vector<40x10xf32> to vector<1x2xf32>
    %12 = vector.extract_strided_slice %1 {offsets = [0, 0], sizes = [1, 10], strides = [1, 1]} : vector<10x10xf32> to vector<1x10xf32>
    %13 = vector.extract_strided_slice %1 {offsets = [1, 0], sizes = [1, 10], strides = [1, 1]} : vector<10x10xf32> to vector<1x10xf32>
    %14 = vector.extract_strided_slice %1 {offsets = [2, 0], sizes = [1, 10], strides = [1, 1]} : vector<10x10xf32> to vector<1x10xf32>
    %15 = vector.extract_strided_slice %1 {offsets = [3, 0], sizes = [1, 10], strides = [1, 1]} : vector<10x10xf32> to vector<1x10xf32>
    %16 = vector.extract_strided_slice %1 {offsets = [4, 0], sizes = [1, 10], strides = [1, 1]} : vector<10x10xf32> to vector<1x10xf32>
    %17 = vector.extract_strided_slice %1 {offsets = [5, 0], sizes = [1, 10], strides = [1, 1]} : vector<10x10xf32> to vector<1x10xf32>
    %18 = vector.extract_strided_slice %1 {offsets = [6, 0], sizes = [1, 10], strides = [1, 1]} : vector<10x10xf32> to vector<1x10xf32>
    %19 = vector.extract_strided_slice %1 {offsets = [7, 0], sizes = [1, 10], strides = [1, 1]} : vector<10x10xf32> to vector<1x10xf32>
    %20 = vector.extract_strided_slice %1 {offsets = [8, 0], sizes = [1, 10], strides = [1, 1]} : vector<10x10xf32> to vector<1x10xf32>
    %21 = vector.extract_strided_slice %1 {offsets = [9, 0], sizes = [1, 10], strides = [1, 1]} : vector<10x10xf32> to vector<1x10xf32>
    %c0_1 = arith.constant 0 : index
    %c0_2 = arith.constant 0 : index
    %22 = vector.load %arg0[%c0_1, %c0_2] : memref<18x2xf32, #tpu.memory_space<vmem>>, vector<18x2xf32>
    %23 = vector.extract_strided_slice %22 {offsets = [0, 0], sizes = [16, 2], strides = [1, 1]} : vector<18x2xf32> to vector<16x2xf32>
    %24 = vector.extract_strided_slice %22 {offsets = [16, 0], sizes = [2, 2], strides = [1, 1]} : vector<18x2xf32> to vector<2x2xf32>
    %cst = arith.constant dense<0.000000e+00> : vector<16x10xf32>
    %25 = tpu.matmul %23, %2, %cst {dimension_numbers = #tpu.dot_dimension_numbers<[1], [0], [0], [1], [0, 0, 1, 1], [], []>} : vector<16x2xf32>, vector<2x10xf32>, vector<16x10xf32> -> vector<16x10xf32>
    %26 = vector.broadcast %4 : vector<1x10xf32> to vector<16x10xf32>
    %27 = arith.addf %25, %26 : vector<16x10xf32>
    %cst_3 = arith.constant 0.000000e+00 : f32
    %28 = vector.broadcast %cst_3 : f32 to vector<2x10xf32>
    %29 = vector.extract_strided_slice %27 {offsets = [0, 0], sizes = [2, 10], strides = [1, 1]} : vector<16x10xf32> to vector<2x10xf32>
    %30 = vector.extract_strided_slice %28 {offsets = [0, 0], sizes = [2, 1], strides = [1, 1]} : vector<2x10xf32> to vector<2x1xf32>
    %31 = vector.broadcast %30 : vector<2x1xf32> to vector<2x10xf32>
    %32 = vector.broadcast %12 : vector<1x10xf32> to vector<2x10xf32>
    %33 = arith.mulf %31, %32 : vector<2x10xf32>
    %34 = arith.addf %29, %33 : vector<2x10xf32>
    %35 = vector.extract_strided_slice %28 {offsets = [0, 1], sizes = [2, 1], strides = [1, 1]} : vector<2x10xf32> to vector<2x1xf32>
    %36 = vector.broadcast %35 : vector<2x1xf32> to vector<2x10xf32>
    %37 = vector.broadcast %13 : vector<1x10xf32> to vector<2x10xf32>
    %38 = arith.mulf %36, %37 : vector<2x10xf32>
    %39 = arith.addf %34, %38 : vector<2x10xf32>
    %40 = vector.extract_strided_slice %28 {offsets = [0, 2], sizes = [2, 1], strides = [1, 1]} : vector<2x10xf32> to vector<2x1xf32>
    %41 = vector.broadcast %40 : vector<2x1xf32> to vector<2x10xf32>
    %42 = vector.broadcast %14 : vector<1x10xf32> to vector<2x10xf32>
    %43 = arith.mulf %41, %42 : vector<2x10xf32>
    %44 = arith.addf %39, %43 : vector<2x10xf32>
    %45 = vector.extract_strided_slice %28 {offsets = [0, 3], sizes = [2, 1], strides = [1, 1]} : vector<2x10xf32> to vector<2x1xf32>
    %46 = vector.broadcast %45 : vector<2x1xf32> to vector<2x10xf32>
    %47 = vector.broadcast %15 : vector<1x10xf32> to vector<2x10xf32>
    %48 = arith.mulf %46, %47 : vector<2x10xf32>
    %49 = arith.addf %44, %48 : vector<2x10xf32>
    %50 = vector.extract_strided_slice %28 {offsets = [0, 4], sizes = [2, 1], strides = [1, 1]} : vector<2x10xf32> to vector<2x1xf32>
    %51 = vector.broadcast %50 : vector<2x1xf32> to vector<2x10xf32>
    %52 = vector.broadcast %16 : vector<1x10xf32> to vector<2x10xf32>
    %53 = arith.mulf %51, %52 : vector<2x10xf32>
    %54 = arith.addf %49, %53 : vector<2x10xf32>
    %55 = vector.extract_strided_slice %28 {offsets = [0, 5], sizes = [2, 1], strides = [1, 1]} : vector<2x10xf32> to vector<2x1xf32>
    %56 = vector.broadcast %55 : vector<2x1xf32> to vector<2x10xf32>
    %57 = vector.broadcast %17 : vector<1x10xf32> to vector<2x10xf32>
    %58 = arith.mulf %56, %57 : vector<2x10xf32>
    %59 = arith.addf %54, %58 : vector<2x10xf32>
    %60 = vector.extract_strided_slice %28 {offsets = [0, 6], sizes = [2, 1], strides = [1, 1]} : vector<2x10xf32> to vector<2x1xf32>
    %61 = vector.broadcast %60 : vector<2x1xf32> to vector<2x10xf32>
    %62 = vector.broadcast %18 : vector<1x10xf32> to vector<2x10xf32>
    %63 = arith.mulf %61, %62 : vector<2x10xf32>
    %64 = arith.addf %59, %63 : vector<2x10xf32>
    %65 = vector.extract_strided_slice %28 {offsets = [0, 7], sizes = [2, 1], strides = [1, 1]} : vector<2x10xf32> to vector<2x1xf32>
    %66 = vector.broadcast %65 : vector<2x1xf32> to vector<2x10xf32>
    %67 = vector.broadcast %19 : vector<1x10xf32> to vector<2x10xf32>
    %68 = arith.mulf %66, %67 : vector<2x10xf32>
    %69 = arith.addf %64, %68 : vector<2x10xf32>
    %70 = vector.extract_strided_slice %28 {offsets = [0, 8], sizes = [2, 1], strides = [1, 1]} : vector<2x10xf32> to vector<2x1xf32>
    %71 = vector.broadcast %70 : vector<2x1xf32> to vector<2x10xf32>
    %72 = vector.broadcast %20 : vector<1x10xf32> to vector<2x10xf32>
    %73 = arith.mulf %71, %72 : vector<2x10xf32>
    %74 = arith.addf %69, %73 : vector<2x10xf32>
    %75 = vector.extract_strided_slice %28 {offsets = [0, 9], sizes = [2, 1], strides = [1, 1]} : vector<2x10xf32> to vector<2x1xf32>
    %76 = vector.broadcast %75 : vector<2x1xf32> to vector<2x10xf32>
    %77 = vector.broadcast %21 : vector<1x10xf32> to vector<2x10xf32>
    %78 = arith.mulf %76, %77 : vector<2x10xf32>
    %79 = arith.addf %74, %78 : vector<2x10xf32>
    %80 = math.tanh %79 : vector<2x10xf32>
    %81 = vector.extract_strided_slice %27 {offsets = [2, 0], sizes = [2, 10], strides = [1, 1]} : vector<16x10xf32> to vector<2x10xf32>
    %82 = vector.extract_strided_slice %80 {offsets = [0, 0], sizes = [2, 1], strides = [1, 1]} : vector<2x10xf32> to vector<2x1xf32>
    %83 = vector.broadcast %82 : vector<2x1xf32> to vector<2x10xf32>
    %84 = vector.broadcast %12 : vector<1x10xf32> to vector<2x10xf32>
    %85 = arith.mulf %83, %84 : vector<2x10xf32>
    %86 = arith.addf %81, %85 : vector<2x10xf32>
    %87 = vector.extract_strided_slice %80 {offsets = [0, 1], sizes = [2, 1], strides = [1, 1]} : vector<2x10xf32> to vector<2x1xf32>
    %88 = vector.broadcast %87 : vector<2x1xf32> to vector<2x10xf32>
    %89 = vector.broadcast %13 : vector<1x10xf32> to vector<2x10xf32>
    %90 = arith.mulf %88, %89 : vector<2x10xf32>
    %91 = arith.addf %86, %90 : vector<2x10xf32>
    %92 = vector.extract_strided_slice %80 {offsets = [0, 2], sizes = [2, 1], strides = [1, 1]} : vector<2x10xf32> to vector<2x1xf32>
    %93 = vector.broadcast %92 : vector<2x1xf32> to vector<2x10xf32>
    %94 = vector.broadcast %14 : vector<1x10xf32> to vector<2x10xf32>
    %95 = arith.mulf %93, %94 : vector<2x10xf32>
    %96 = arith.addf %91, %95 : vector<2x10xf32>
    %97 = vector.extract_strided_slice %80 {offsets = [0, 3], sizes = [2, 1], strides = [1, 1]} : vector<2x10xf32> to vector<2x1xf32>
    %98 = vector.broadcast %97 : vector<2x1xf32> to vector<2x10xf32>
    %99 = vector.broadcast %15 : vector<1x10xf32> to vector<2x10xf32>
    %100 = arith.mulf %98, %99 : vector<2x10xf32>
    %101 = arith.addf %96, %100 : vector<2x10xf32>
    %102 = vector.extract_strided_slice %80 {offsets = [0, 4], sizes = [2, 1], strides = [1, 1]} : vector<2x10xf32> to vector<2x1xf32>
    %103 = vector.broadcast %102 : vector<2x1xf32> to vector<2x10xf32>
    %104 = vector.broadcast %16 : vector<1x10xf32> to vector<2x10xf32>
    %105 = arith.mulf %103, %104 : vector<2x10xf32>
    %106 = arith.addf %101, %105 : vector<2x10xf32>
    %107 = vector.extract_strided_slice %80 {offsets = [0, 5], sizes = [2, 1], strides = [1, 1]} : vector<2x10xf32> to vector<2x1xf32>
    %108 = vector.broadcast %107 : vector<2x1xf32> to vector<2x10xf32>
    %109 = vector.broadcast %17 : vector<1x10xf32> to vector<2x10xf32>
    %110 = arith.mulf %108, %109 : vector<2x10xf32>
    %111 = arith.addf %106, %110 : vector<2x10xf32>
    %112 = vector.extract_strided_slice %80 {offsets = [0, 6], sizes = [2, 1], strides = [1, 1]} : vector<2x10xf32> to vector<2x1xf32>
    %113 = vector.broadcast %112 : vector<2x1xf32> to vector<2x10xf32>
    %114 = vector.broadcast %18 : vector<1x10xf32> to vector<2x10xf32>
    %115 = arith.mulf %113, %114 : vector<2x10xf32>
    %116 = arith.addf %111, %115 : vector<2x10xf32>
    %117 = vector.extract_strided_slice %80 {offsets = [0, 7], sizes = [2, 1], strides = [1, 1]} : vector<2x10xf32> to vector<2x1xf32>
    %118 = vector.broadcast %117 : vector<2x1xf32> to vector<2x10xf32>
    %119 = vector.broadcast %19 : vector<1x10xf32> to vector<2x10xf32>
    %120 = arith.mulf %118, %119 : vector<2x10xf32>
    %121 = arith.addf %116, %120 : vector<2x10xf32>
    %122 = vector.extract_strided_slice %80 {offsets = [0, 8], sizes = [2, 1], strides = [1, 1]} : vector<2x10xf32> to vector<2x1xf32>
    %123 = vector.broadcast %122 : vector<2x1xf32> to vector<2x10xf32>
    %124 = vector.broadcast %20 : vector<1x10xf32> to vector<2x10xf32>
    %125 = arith.mulf %123, %124 : vector<2x10xf32>
    %126 = arith.addf %121, %125 : vector<2x10xf32>
    %127 = vector.extract_strided_slice %80 {offsets = [0, 9], sizes = [2, 1], strides = [1, 1]} : vector<2x10xf32> to vector<2x1xf32>
    %128 = vector.broadcast %127 : vector<2x1xf32> to vector<2x10xf32>
    %129 = vector.broadcast %21 : vector<1x10xf32> to vector<2x10xf32>
    %130 = arith.mulf %128, %129 : vector<2x10xf32>
    %131 = arith.addf %126, %130 : vector<2x10xf32>
    %132 = math.tanh %131 : vector<2x10xf32>
    %133 = vector.extract_strided_slice %27 {offsets = [4, 0], sizes = [2, 10], strides = [1, 1]} : vector<16x10xf32> to vector<2x10xf32>
    %134 = vector.extract_strided_slice %132 {offsets = [0, 0], sizes = [2, 1], strides = [1, 1]} : vector<2x10xf32> to vector<2x1xf32>
    %135 = vector.broadcast %134 : vector<2x1xf32> to vector<2x10xf32>
    %136 = vector.broadcast %12 : vector<1x10xf32> to vector<2x10xf32>
    %137 = arith.mulf %135, %136 : vector<2x10xf32>
    %138 = arith.addf %133, %137 : vector<2x10xf32>
    %139 = vector.extract_strided_slice %132 {offsets = [0, 1], sizes = [2, 1], strides = [1, 1]} : vector<2x10xf32> to vector<2x1xf32>
    %140 = vector.broadcast %139 : vector<2x1xf32> to vector<2x10xf32>
    %141 = vector.broadcast %13 : vector<1x10xf32> to vector<2x10xf32>
    %142 = arith.mulf %140, %141 : vector<2x10xf32>
    %143 = arith.addf %138, %142 : vector<2x10xf32>
    %144 = vector.extract_strided_slice %132 {offsets = [0, 2], sizes = [2, 1], strides = [1, 1]} : vector<2x10xf32> to vector<2x1xf32>
    %145 = vector.broadcast %144 : vector<2x1xf32> to vector<2x10xf32>
    %146 = vector.broadcast %14 : vector<1x10xf32> to vector<2x10xf32>
    %147 = arith.mulf %145, %146 : vector<2x10xf32>
    %148 = arith.addf %143, %147 : vector<2x10xf32>
    %149 = vector.extract_strided_slice %132 {offsets = [0, 3], sizes = [2, 1], strides = [1, 1]} : vector<2x10xf32> to vector<2x1xf32>
    %150 = vector.broadcast %149 : vector<2x1xf32> to vector<2x10xf32>
    %151 = vector.broadcast %15 : vector<1x10xf32> to vector<2x10xf32>
    %152 = arith.mulf %150, %151 : vector<2x10xf32>
    %153 = arith.addf %148, %152 : vector<2x10xf32>
    %154 = vector.extract_strided_slice %132 {offsets = [0, 4], sizes = [2, 1], strides = [1, 1]} : vector<2x10xf32> to vector<2x1xf32>
    %155 = vector.broadcast %154 : vector<2x1xf32> to vector<2x10xf32>
    %156 = vector.broadcast %16 : vector<1x10xf32> to vector<2x10xf32>
    %157 = arith.mulf %155, %156 : vector<2x10xf32>
    %158 = arith.addf %153, %157 : vector<2x10xf32>
    %159 = vector.extract_strided_slice %132 {offsets = [0, 5], sizes = [2, 1], strides = [1, 1]} : vector<2x10xf32> to vector<2x1xf32>
    %160 = vector.broadcast %159 : vector<2x1xf32> to vector<2x10xf32>
    %161 = vector.broadcast %17 : vector<1x10xf32> to vector<2x10xf32>
    %162 = arith.mulf %160, %161 : vector<2x10xf32>
    %163 = arith.addf %158, %162 : vector<2x10xf32>
    %164 = vector.extract_strided_slice %132 {offsets = [0, 6], sizes = [2, 1], strides = [1, 1]} : vector<2x10xf32> to vector<2x1xf32>
    %165 = vector.broadcast %164 : vector<2x1xf32> to vector<2x10xf32>
    %166 = vector.broadcast %18 : vector<1x10xf32> to vector<2x10xf32>
    %167 = arith.mulf %165, %166 : vector<2x10xf32>
    %168 = arith.addf %163, %167 : vector<2x10xf32>
    %169 = vector.extract_strided_slice %132 {offsets = [0, 7], sizes = [2, 1], strides = [1, 1]} : vector<2x10xf32> to vector<2x1xf32>
    %170 = vector.broadcast %169 : vector<2x1xf32> to vector<2x10xf32>
    %171 = vector.broadcast %19 : vector<1x10xf32> to vector<2x10xf32>
    %172 = arith.mulf %170, %171 : vector<2x10xf32>
    %173 = arith.addf %168, %172 : vector<2x10xf32>
    %174 = vector.extract_strided_slice %132 {offsets = [0, 8], sizes = [2, 1], strides = [1, 1]} : vector<2x10xf32> to vector<2x1xf32>
    %175 = vector.broadcast %174 : vector<2x1xf32> to vector<2x10xf32>
    %176 = vector.broadcast %20 : vector<1x10xf32> to vector<2x10xf32>
    %177 = arith.mulf %175, %176 : vector<2x10xf32>
    %178 = arith.addf %173, %177 : vector<2x10xf32>
    %179 = vector.extract_strided_slice %132 {offsets = [0, 9], sizes = [2, 1], strides = [1, 1]} : vector<2x10xf32> to vector<2x1xf32>
    %180 = vector.broadcast %179 : vector<2x1xf32> to vector<2x10xf32>
    %181 = vector.broadcast %21 : vector<1x10xf32> to vector<2x10xf32>
    %182 = arith.mulf %180, %181 : vector<2x10xf32>
    %183 = arith.addf %178, %182 : vector<2x10xf32>
    %184 = math.tanh %183 : vector<2x10xf32>
    %185 = vector.extract_strided_slice %27 {offsets = [6, 0], sizes = [2, 10], strides = [1, 1]} : vector<16x10xf32> to vector<2x10xf32>
    %186 = vector.extract_strided_slice %184 {offsets = [0, 0], sizes = [2, 1], strides = [1, 1]} : vector<2x10xf32> to vector<2x1xf32>
    %187 = vector.broadcast %186 : vector<2x1xf32> to vector<2x10xf32>
    %188 = vector.broadcast %12 : vector<1x10xf32> to vector<2x10xf32>
    %189 = arith.mulf %187, %188 : vector<2x10xf32>
    %190 = arith.addf %185, %189 : vector<2x10xf32>
    %191 = vector.extract_strided_slice %184 {offsets = [0, 1], sizes = [2, 1], strides = [1, 1]} : vector<2x10xf32> to vector<2x1xf32>
    %192 = vector.broadcast %191 : vector<2x1xf32> to vector<2x10xf32>
    %193 = vector.broadcast %13 : vector<1x10xf32> to vector<2x10xf32>
    %194 = arith.mulf %192, %193 : vector<2x10xf32>
    %195 = arith.addf %190, %194 : vector<2x10xf32>
    %196 = vector.extract_strided_slice %184 {offsets = [0, 2], sizes = [2, 1], strides = [1, 1]} : vector<2x10xf32> to vector<2x1xf32>
    %197 = vector.broadcast %196 : vector<2x1xf32> to vector<2x10xf32>
    %198 = vector.broadcast %14 : vector<1x10xf32> to vector<2x10xf32>
    %199 = arith.mulf %197, %198 : vector<2x10xf32>
    %200 = arith.addf %195, %199 : vector<2x10xf32>
    %201 = vector.extract_strided_slice %184 {offsets = [0, 3], sizes = [2, 1], strides = [1, 1]} : vector<2x10xf32> to vector<2x1xf32>
    %202 = vector.broadcast %201 : vector<2x1xf32> to vector<2x10xf32>
    %203 = vector.broadcast %15 : vector<1x10xf32> to vector<2x10xf32>
    %204 = arith.mulf %202, %203 : vector<2x10xf32>
    %205 = arith.addf %200, %204 : vector<2x10xf32>
    %206 = vector.extract_strided_slice %184 {offsets = [0, 4], sizes = [2, 1], strides = [1, 1]} : vector<2x10xf32> to vector<2x1xf32>
    %207 = vector.broadcast %206 : vector<2x1xf32> to vector<2x10xf32>
    %208 = vector.broadcast %16 : vector<1x10xf32> to vector<2x10xf32>
    %209 = arith.mulf %207, %208 : vector<2x10xf32>
    %210 = arith.addf %205, %209 : vector<2x10xf32>
    %211 = vector.extract_strided_slice %184 {offsets = [0, 5], sizes = [2, 1], strides = [1, 1]} : vector<2x10xf32> to vector<2x1xf32>
    %212 = vector.broadcast %211 : vector<2x1xf32> to vector<2x10xf32>
    %213 = vector.broadcast %17 : vector<1x10xf32> to vector<2x10xf32>
    %214 = arith.mulf %212, %213 : vector<2x10xf32>
    %215 = arith.addf %210, %214 : vector<2x10xf32>
    %216 = vector.extract_strided_slice %184 {offsets = [0, 6], sizes = [2, 1], strides = [1, 1]} : vector<2x10xf32> to vector<2x1xf32>
    %217 = vector.broadcast %216 : vector<2x1xf32> to vector<2x10xf32>
    %218 = vector.broadcast %18 : vector<1x10xf32> to vector<2x10xf32>
    %219 = arith.mulf %217, %218 : vector<2x10xf32>
    %220 = arith.addf %215, %219 : vector<2x10xf32>
    %221 = vector.extract_strided_slice %184 {offsets = [0, 7], sizes = [2, 1], strides = [1, 1]} : vector<2x10xf32> to vector<2x1xf32>
    %222 = vector.broadcast %221 : vector<2x1xf32> to vector<2x10xf32>
    %223 = vector.broadcast %19 : vector<1x10xf32> to vector<2x10xf32>
    %224 = arith.mulf %222, %223 : vector<2x10xf32>
    %225 = arith.addf %220, %224 : vector<2x10xf32>
    %226 = vector.extract_strided_slice %184 {offsets = [0, 8], sizes = [2, 1], strides = [1, 1]} : vector<2x10xf32> to vector<2x1xf32>
    %227 = vector.broadcast %226 : vector<2x1xf32> to vector<2x10xf32>
    %228 = vector.broadcast %20 : vector<1x10xf32> to vector<2x10xf32>
    %229 = arith.mulf %227, %228 : vector<2x10xf32>
    %230 = arith.addf %225, %229 : vector<2x10xf32>
    %231 = vector.extract_strided_slice %184 {offsets = [0, 9], sizes = [2, 1], strides = [1, 1]} : vector<2x10xf32> to vector<2x1xf32>
    %232 = vector.broadcast %231 : vector<2x1xf32> to vector<2x10xf32>
    %233 = vector.broadcast %21 : vector<1x10xf32> to vector<2x10xf32>
    %234 = arith.mulf %232, %233 : vector<2x10xf32>
    %235 = arith.addf %230, %234 : vector<2x10xf32>
    %236 = math.tanh %235 : vector<2x10xf32>
    %237 = vector.extract_strided_slice %27 {offsets = [8, 0], sizes = [2, 10], strides = [1, 1]} : vector<16x10xf32> to vector<2x10xf32>
    %238 = vector.extract_strided_slice %236 {offsets = [0, 0], sizes = [2, 1], strides = [1, 1]} : vector<2x10xf32> to vector<2x1xf32>
    %239 = vector.broadcast %238 : vector<2x1xf32> to vector<2x10xf32>
    %240 = vector.broadcast %12 : vector<1x10xf32> to vector<2x10xf32>
    %241 = arith.mulf %239, %240 : vector<2x10xf32>
    %242 = arith.addf %237, %241 : vector<2x10xf32>
    %243 = vector.extract_strided_slice %236 {offsets = [0, 1], sizes = [2, 1], strides = [1, 1]} : vector<2x10xf32> to vector<2x1xf32>
    %244 = vector.broadcast %243 : vector<2x1xf32> to vector<2x10xf32>
    %245 = vector.broadcast %13 : vector<1x10xf32> to vector<2x10xf32>
    %246 = arith.mulf %244, %245 : vector<2x10xf32>
    %247 = arith.addf %242, %246 : vector<2x10xf32>
    %248 = vector.extract_strided_slice %236 {offsets = [0, 2], sizes = [2, 1], strides = [1, 1]} : vector<2x10xf32> to vector<2x1xf32>
    %249 = vector.broadcast %248 : vector<2x1xf32> to vector<2x10xf32>
    %250 = vector.broadcast %14 : vector<1x10xf32> to vector<2x10xf32>
    %251 = arith.mulf %249, %250 : vector<2x10xf32>
    %252 = arith.addf %247, %251 : vector<2x10xf32>
    %253 = vector.extract_strided_slice %236 {offsets = [0, 3], sizes = [2, 1], strides = [1, 1]} : vector<2x10xf32> to vector<2x1xf32>
    %254 = vector.broadcast %253 : vector<2x1xf32> to vector<2x10xf32>
    %255 = vector.broadcast %15 : vector<1x10xf32> to vector<2x10xf32>
    %256 = arith.mulf %254, %255 : vector<2x10xf32>
    %257 = arith.addf %252, %256 : vector<2x10xf32>
    %258 = vector.extract_strided_slice %236 {offsets = [0, 4], sizes = [2, 1], strides = [1, 1]} : vector<2x10xf32> to vector<2x1xf32>
    %259 = vector.broadcast %258 : vector<2x1xf32> to vector<2x10xf32>
    %260 = vector.broadcast %16 : vector<1x10xf32> to vector<2x10xf32>
    %261 = arith.mulf %259, %260 : vector<2x10xf32>
    %262 = arith.addf %257, %261 : vector<2x10xf32>
    %263 = vector.extract_strided_slice %236 {offsets = [0, 5], sizes = [2, 1], strides = [1, 1]} : vector<2x10xf32> to vector<2x1xf32>
    %264 = vector.broadcast %263 : vector<2x1xf32> to vector<2x10xf32>
    %265 = vector.broadcast %17 : vector<1x10xf32> to vector<2x10xf32>
    %266 = arith.mulf %264, %265 : vector<2x10xf32>
    %267 = arith.addf %262, %266 : vector<2x10xf32>
    %268 = vector.extract_strided_slice %236 {offsets = [0, 6], sizes = [2, 1], strides = [1, 1]} : vector<2x10xf32> to vector<2x1xf32>
    %269 = vector.broadcast %268 : vector<2x1xf32> to vector<2x10xf32>
    %270 = vector.broadcast %18 : vector<1x10xf32> to vector<2x10xf32>
    %271 = arith.mulf %269, %270 : vector<2x10xf32>
    %272 = arith.addf %267, %271 : vector<2x10xf32>
    %273 = vector.extract_strided_slice %236 {offsets = [0, 7], sizes = [2, 1], strides = [1, 1]} : vector<2x10xf32> to vector<2x1xf32>
    %274 = vector.broadcast %273 : vector<2x1xf32> to vector<2x10xf32>
    %275 = vector.broadcast %19 : vector<1x10xf32> to vector<2x10xf32>
    %276 = arith.mulf %274, %275 : vector<2x10xf32>
    %277 = arith.addf %272, %276 : vector<2x10xf32>
    %278 = vector.extract_strided_slice %236 {offsets = [0, 8], sizes = [2, 1], strides = [1, 1]} : vector<2x10xf32> to vector<2x1xf32>
    %279 = vector.broadcast %278 : vector<2x1xf32> to vector<2x10xf32>
    %280 = vector.broadcast %20 : vector<1x10xf32> to vector<2x10xf32>
    %281 = arith.mulf %279, %280 : vector<2x10xf32>
    %282 = arith.addf %277, %281 : vector<2x10xf32>
    %283 = vector.extract_strided_slice %236 {offsets = [0, 9], sizes = [2, 1], strides = [1, 1]} : vector<2x10xf32> to vector<2x1xf32>
    %284 = vector.broadcast %283 : vector<2x1xf32> to vector<2x10xf32>
    %285 = vector.broadcast %21 : vector<1x10xf32> to vector<2x10xf32>
    %286 = arith.mulf %284, %285 : vector<2x10xf32>
    %287 = arith.addf %282, %286 : vector<2x10xf32>
    %288 = math.tanh %287 : vector<2x10xf32>
    %289 = vector.extract_strided_slice %27 {offsets = [10, 0], sizes = [2, 10], strides = [1, 1]} : vector<16x10xf32> to vector<2x10xf32>
    %290 = vector.extract_strided_slice %288 {offsets = [0, 0], sizes = [2, 1], strides = [1, 1]} : vector<2x10xf32> to vector<2x1xf32>
    %291 = vector.broadcast %290 : vector<2x1xf32> to vector<2x10xf32>
    %292 = vector.broadcast %12 : vector<1x10xf32> to vector<2x10xf32>
    %293 = arith.mulf %291, %292 : vector<2x10xf32>
    %294 = arith.addf %289, %293 : vector<2x10xf32>
    %295 = vector.extract_strided_slice %288 {offsets = [0, 1], sizes = [2, 1], strides = [1, 1]} : vector<2x10xf32> to vector<2x1xf32>
    %296 = vector.broadcast %295 : vector<2x1xf32> to vector<2x10xf32>
    %297 = vector.broadcast %13 : vector<1x10xf32> to vector<2x10xf32>
    %298 = arith.mulf %296, %297 : vector<2x10xf32>
    %299 = arith.addf %294, %298 : vector<2x10xf32>
    %300 = vector.extract_strided_slice %288 {offsets = [0, 2], sizes = [2, 1], strides = [1, 1]} : vector<2x10xf32> to vector<2x1xf32>
    %301 = vector.broadcast %300 : vector<2x1xf32> to vector<2x10xf32>
    %302 = vector.broadcast %14 : vector<1x10xf32> to vector<2x10xf32>
    %303 = arith.mulf %301, %302 : vector<2x10xf32>
    %304 = arith.addf %299, %303 : vector<2x10xf32>
    %305 = vector.extract_strided_slice %288 {offsets = [0, 3], sizes = [2, 1], strides = [1, 1]} : vector<2x10xf32> to vector<2x1xf32>
    %306 = vector.broadcast %305 : vector<2x1xf32> to vector<2x10xf32>
    %307 = vector.broadcast %15 : vector<1x10xf32> to vector<2x10xf32>
    %308 = arith.mulf %306, %307 : vector<2x10xf32>
    %309 = arith.addf %304, %308 : vector<2x10xf32>
    %310 = vector.extract_strided_slice %288 {offsets = [0, 4], sizes = [2, 1], strides = [1, 1]} : vector<2x10xf32> to vector<2x1xf32>
    %311 = vector.broadcast %310 : vector<2x1xf32> to vector<2x10xf32>
    %312 = vector.broadcast %16 : vector<1x10xf32> to vector<2x10xf32>
    %313 = arith.mulf %311, %312 : vector<2x10xf32>
    %314 = arith.addf %309, %313 : vector<2x10xf32>
    %315 = vector.extract_strided_slice %288 {offsets = [0, 5], sizes = [2, 1], strides = [1, 1]} : vector<2x10xf32> to vector<2x1xf32>
    %316 = vector.broadcast %315 : vector<2x1xf32> to vector<2x10xf32>
    %317 = vector.broadcast %17 : vector<1x10xf32> to vector<2x10xf32>
    %318 = arith.mulf %316, %317 : vector<2x10xf32>
    %319 = arith.addf %314, %318 : vector<2x10xf32>
    %320 = vector.extract_strided_slice %288 {offsets = [0, 6], sizes = [2, 1], strides = [1, 1]} : vector<2x10xf32> to vector<2x1xf32>
    %321 = vector.broadcast %320 : vector<2x1xf32> to vector<2x10xf32>
    %322 = vector.broadcast %18 : vector<1x10xf32> to vector<2x10xf32>
    %323 = arith.mulf %321, %322 : vector<2x10xf32>
    %324 = arith.addf %319, %323 : vector<2x10xf32>
    %325 = vector.extract_strided_slice %288 {offsets = [0, 7], sizes = [2, 1], strides = [1, 1]} : vector<2x10xf32> to vector<2x1xf32>
    %326 = vector.broadcast %325 : vector<2x1xf32> to vector<2x10xf32>
    %327 = vector.broadcast %19 : vector<1x10xf32> to vector<2x10xf32>
    %328 = arith.mulf %326, %327 : vector<2x10xf32>
    %329 = arith.addf %324, %328 : vector<2x10xf32>
    %330 = vector.extract_strided_slice %288 {offsets = [0, 8], sizes = [2, 1], strides = [1, 1]} : vector<2x10xf32> to vector<2x1xf32>
    %331 = vector.broadcast %330 : vector<2x1xf32> to vector<2x10xf32>
    %332 = vector.broadcast %20 : vector<1x10xf32> to vector<2x10xf32>
    %333 = arith.mulf %331, %332 : vector<2x10xf32>
    %334 = arith.addf %329, %333 : vector<2x10xf32>
    %335 = vector.extract_strided_slice %288 {offsets = [0, 9], sizes = [2, 1], strides = [1, 1]} : vector<2x10xf32> to vector<2x1xf32>
    %336 = vector.broadcast %335 : vector<2x1xf32> to vector<2x10xf32>
    %337 = vector.broadcast %21 : vector<1x10xf32> to vector<2x10xf32>
    %338 = arith.mulf %336, %337 : vector<2x10xf32>
    %339 = arith.addf %334, %338 : vector<2x10xf32>
    %340 = math.tanh %339 : vector<2x10xf32>
    %341 = vector.extract_strided_slice %27 {offsets = [12, 0], sizes = [2, 10], strides = [1, 1]} : vector<16x10xf32> to vector<2x10xf32>
    %342 = vector.extract_strided_slice %340 {offsets = [0, 0], sizes = [2, 1], strides = [1, 1]} : vector<2x10xf32> to vector<2x1xf32>
    %343 = vector.broadcast %342 : vector<2x1xf32> to vector<2x10xf32>
    %344 = vector.broadcast %12 : vector<1x10xf32> to vector<2x10xf32>
    %345 = arith.mulf %343, %344 : vector<2x10xf32>
    %346 = arith.addf %341, %345 : vector<2x10xf32>
    %347 = vector.extract_strided_slice %340 {offsets = [0, 1], sizes = [2, 1], strides = [1, 1]} : vector<2x10xf32> to vector<2x1xf32>
    %348 = vector.broadcast %347 : vector<2x1xf32> to vector<2x10xf32>
    %349 = vector.broadcast %13 : vector<1x10xf32> to vector<2x10xf32>
    %350 = arith.mulf %348, %349 : vector<2x10xf32>
    %351 = arith.addf %346, %350 : vector<2x10xf32>
    %352 = vector.extract_strided_slice %340 {offsets = [0, 2], sizes = [2, 1], strides = [1, 1]} : vector<2x10xf32> to vector<2x1xf32>
    %353 = vector.broadcast %352 : vector<2x1xf32> to vector<2x10xf32>
    %354 = vector.broadcast %14 : vector<1x10xf32> to vector<2x10xf32>
    %355 = arith.mulf %353, %354 : vector<2x10xf32>
    %356 = arith.addf %351, %355 : vector<2x10xf32>
    %357 = vector.extract_strided_slice %340 {offsets = [0, 3], sizes = [2, 1], strides = [1, 1]} : vector<2x10xf32> to vector<2x1xf32>
    %358 = vector.broadcast %357 : vector<2x1xf32> to vector<2x10xf32>
    %359 = vector.broadcast %15 : vector<1x10xf32> to vector<2x10xf32>
    %360 = arith.mulf %358, %359 : vector<2x10xf32>
    %361 = arith.addf %356, %360 : vector<2x10xf32>
    %362 = vector.extract_strided_slice %340 {offsets = [0, 4], sizes = [2, 1], strides = [1, 1]} : vector<2x10xf32> to vector<2x1xf32>
    %363 = vector.broadcast %362 : vector<2x1xf32> to vector<2x10xf32>
    %364 = vector.broadcast %16 : vector<1x10xf32> to vector<2x10xf32>
    %365 = arith.mulf %363, %364 : vector<2x10xf32>
    %366 = arith.addf %361, %365 : vector<2x10xf32>
    %367 = vector.extract_strided_slice %340 {offsets = [0, 5], sizes = [2, 1], strides = [1, 1]} : vector<2x10xf32> to vector<2x1xf32>
    %368 = vector.broadcast %367 : vector<2x1xf32> to vector<2x10xf32>
    %369 = vector.broadcast %17 : vector<1x10xf32> to vector<2x10xf32>
    %370 = arith.mulf %368, %369 : vector<2x10xf32>
    %371 = arith.addf %366, %370 : vector<2x10xf32>
    %372 = vector.extract_strided_slice %340 {offsets = [0, 6], sizes = [2, 1], strides = [1, 1]} : vector<2x10xf32> to vector<2x1xf32>
    %373 = vector.broadcast %372 : vector<2x1xf32> to vector<2x10xf32>
    %374 = vector.broadcast %18 : vector<1x10xf32> to vector<2x10xf32>
    %375 = arith.mulf %373, %374 : vector<2x10xf32>
    %376 = arith.addf %371, %375 : vector<2x10xf32>
    %377 = vector.extract_strided_slice %340 {offsets = [0, 7], sizes = [2, 1], strides = [1, 1]} : vector<2x10xf32> to vector<2x1xf32>
    %378 = vector.broadcast %377 : vector<2x1xf32> to vector<2x10xf32>
    %379 = vector.broadcast %19 : vector<1x10xf32> to vector<2x10xf32>
    %380 = arith.mulf %378, %379 : vector<2x10xf32>
    %381 = arith.addf %376, %380 : vector<2x10xf32>
    %382 = vector.extract_strided_slice %340 {offsets = [0, 8], sizes = [2, 1], strides = [1, 1]} : vector<2x10xf32> to vector<2x1xf32>
    %383 = vector.broadcast %382 : vector<2x1xf32> to vector<2x10xf32>
    %384 = vector.broadcast %20 : vector<1x10xf32> to vector<2x10xf32>
    %385 = arith.mulf %383, %384 : vector<2x10xf32>
    %386 = arith.addf %381, %385 : vector<2x10xf32>
    %387 = vector.extract_strided_slice %340 {offsets = [0, 9], sizes = [2, 1], strides = [1, 1]} : vector<2x10xf32> to vector<2x1xf32>
    %388 = vector.broadcast %387 : vector<2x1xf32> to vector<2x10xf32>
    %389 = vector.broadcast %21 : vector<1x10xf32> to vector<2x10xf32>
    %390 = arith.mulf %388, %389 : vector<2x10xf32>
    %391 = arith.addf %386, %390 : vector<2x10xf32>
    %392 = math.tanh %391 : vector<2x10xf32>
    %393 = vector.extract_strided_slice %27 {offsets = [14, 0], sizes = [2, 10], strides = [1, 1]} : vector<16x10xf32> to vector<2x10xf32>
    %394 = vector.extract_strided_slice %392 {offsets = [0, 0], sizes = [2, 1], strides = [1, 1]} : vector<2x10xf32> to vector<2x1xf32>
    %395 = vector.broadcast %394 : vector<2x1xf32> to vector<2x10xf32>
    %396 = vector.broadcast %12 : vector<1x10xf32> to vector<2x10xf32>
    %397 = arith.mulf %395, %396 : vector<2x10xf32>
    %398 = arith.addf %393, %397 : vector<2x10xf32>
    %399 = vector.extract_strided_slice %392 {offsets = [0, 1], sizes = [2, 1], strides = [1, 1]} : vector<2x10xf32> to vector<2x1xf32>
    %400 = vector.broadcast %399 : vector<2x1xf32> to vector<2x10xf32>
    %401 = vector.broadcast %13 : vector<1x10xf32> to vector<2x10xf32>
    %402 = arith.mulf %400, %401 : vector<2x10xf32>
    %403 = arith.addf %398, %402 : vector<2x10xf32>
    %404 = vector.extract_strided_slice %392 {offsets = [0, 2], sizes = [2, 1], strides = [1, 1]} : vector<2x10xf32> to vector<2x1xf32>
    %405 = vector.broadcast %404 : vector<2x1xf32> to vector<2x10xf32>
    %406 = vector.broadcast %14 : vector<1x10xf32> to vector<2x10xf32>
    %407 = arith.mulf %405, %406 : vector<2x10xf32>
    %408 = arith.addf %403, %407 : vector<2x10xf32>
    %409 = vector.extract_strided_slice %392 {offsets = [0, 3], sizes = [2, 1], strides = [1, 1]} : vector<2x10xf32> to vector<2x1xf32>
    %410 = vector.broadcast %409 : vector<2x1xf32> to vector<2x10xf32>
    %411 = vector.broadcast %15 : vector<1x10xf32> to vector<2x10xf32>
    %412 = arith.mulf %410, %411 : vector<2x10xf32>
    %413 = arith.addf %408, %412 : vector<2x10xf32>
    %414 = vector.extract_strided_slice %392 {offsets = [0, 4], sizes = [2, 1], strides = [1, 1]} : vector<2x10xf32> to vector<2x1xf32>
    %415 = vector.broadcast %414 : vector<2x1xf32> to vector<2x10xf32>
    %416 = vector.broadcast %16 : vector<1x10xf32> to vector<2x10xf32>
    %417 = arith.mulf %415, %416 : vector<2x10xf32>
    %418 = arith.addf %413, %417 : vector<2x10xf32>
    %419 = vector.extract_strided_slice %392 {offsets = [0, 5], sizes = [2, 1], strides = [1, 1]} : vector<2x10xf32> to vector<2x1xf32>
    %420 = vector.broadcast %419 : vector<2x1xf32> to vector<2x10xf32>
    %421 = vector.broadcast %17 : vector<1x10xf32> to vector<2x10xf32>
    %422 = arith.mulf %420, %421 : vector<2x10xf32>
    %423 = arith.addf %418, %422 : vector<2x10xf32>
    %424 = vector.extract_strided_slice %392 {offsets = [0, 6], sizes = [2, 1], strides = [1, 1]} : vector<2x10xf32> to vector<2x1xf32>
    %425 = vector.broadcast %424 : vector<2x1xf32> to vector<2x10xf32>
    %426 = vector.broadcast %18 : vector<1x10xf32> to vector<2x10xf32>
    %427 = arith.mulf %425, %426 : vector<2x10xf32>
    %428 = arith.addf %423, %427 : vector<2x10xf32>
    %429 = vector.extract_strided_slice %392 {offsets = [0, 7], sizes = [2, 1], strides = [1, 1]} : vector<2x10xf32> to vector<2x1xf32>
    %430 = vector.broadcast %429 : vector<2x1xf32> to vector<2x10xf32>
    %431 = vector.broadcast %19 : vector<1x10xf32> to vector<2x10xf32>
    %432 = arith.mulf %430, %431 : vector<2x10xf32>
    %433 = arith.addf %428, %432 : vector<2x10xf32>
    %434 = vector.extract_strided_slice %392 {offsets = [0, 8], sizes = [2, 1], strides = [1, 1]} : vector<2x10xf32> to vector<2x1xf32>
    %435 = vector.broadcast %434 : vector<2x1xf32> to vector<2x10xf32>
    %436 = vector.broadcast %20 : vector<1x10xf32> to vector<2x10xf32>
    %437 = arith.mulf %435, %436 : vector<2x10xf32>
    %438 = arith.addf %433, %437 : vector<2x10xf32>
    %439 = vector.extract_strided_slice %392 {offsets = [0, 9], sizes = [2, 1], strides = [1, 1]} : vector<2x10xf32> to vector<2x1xf32>
    %440 = vector.broadcast %439 : vector<2x1xf32> to vector<2x10xf32>
    %441 = vector.broadcast %21 : vector<1x10xf32> to vector<2x10xf32>
    %442 = arith.mulf %440, %441 : vector<2x10xf32>
    %443 = arith.addf %438, %442 : vector<2x10xf32>
    %444 = math.tanh %443 : vector<2x10xf32>
    %cst_4 = arith.constant dense<0.000000e+00> : vector<2x4xf32>
    %445 = tpu.matmul %444, %6, %cst_4 {dimension_numbers = #tpu.dot_dimension_numbers<[1], [0], [0], [1], [0, 0, 1, 1], [], []>} : vector<2x10xf32>, vector<10x4xf32>, vector<2x4xf32> -> vector<2x4xf32>
    %446 = vector.broadcast %7 : vector<1x4xf32> to vector<2x4xf32>
    %447 = arith.addf %445, %446 : vector<2x4xf32>
    %448 = vector.extract_strided_slice %447 {offsets = [0, 0], sizes = [2, 2], strides = [1, 1]} : vector<2x4xf32> to vector<2x2xf32>
    %449 = vector.extract_strided_slice %447 {offsets = [0, 2], sizes = [2, 2], strides = [1, 1]} : vector<2x4xf32> to vector<2x2xf32>
    %cst_5 = arith.constant 5.000000e-01 : f32
    %450 = vector.broadcast %cst_5 : f32 to vector<2x2xf32>
    %451 = arith.mulf %450, %449 : vector<2x2xf32>
    %452 = math.exp %451 : vector<2x2xf32>
    %453 = arith.mulf %24, %452 : vector<2x2xf32>
    %454 = arith.addf %448, %453 : vector<2x2xf32>
    %cst_6 = arith.constant dense<0.000000e+00> : vector<2x10xf32>
    %455 = tpu.matmul %454, %3, %cst_6 {dimension_numbers = #tpu.dot_dimension_numbers<[1], [0], [0], [1], [0, 0, 1, 1], [], []>} : vector<2x2xf32>, vector<2x10xf32>, vector<2x10xf32> -> vector<2x10xf32>
    %456 = vector.broadcast %5 : vector<1x10xf32> to vector<2x10xf32>
    %457 = arith.addf %455, %456 : vector<2x10xf32>
    %cst_7 = arith.constant dense<0.000000e+00> : vector<2x2xf32>
    %458 = tpu.matmul %457, %8, %cst_7 {dimension_numbers = #tpu.dot_dimension_numbers<[1], [0], [0], [1], [0, 0, 1, 1], [], []>} : vector<2x10xf32>, vector<10x2xf32>, vector<2x2xf32> -> vector<2x2xf32>
    %459 = vector.broadcast %9 : vector<1x2xf32> to vector<2x2xf32>
    %460 = arith.addf %458, %459 : vector<2x2xf32>
    %cst_8 = arith.constant 0.000000e+00 : f32
    %461 = vector.broadcast %cst_8 : f32 to vector<2x2xf32>
    %462 = vector.extract_strided_slice %461 {offsets = [0, 0], sizes = [2, 1], strides = [1, 1]} : vector<2x2xf32> to vector<2x1xf32>
    %463 = vector.broadcast %462 : vector<2x1xf32> to vector<2x2xf32>
    %464 = vector.broadcast %10 : vector<1x2xf32> to vector<2x2xf32>
    %465 = arith.mulf %463, %464 : vector<2x2xf32>
    %466 = arith.addf %460, %465 : vector<2x2xf32>
    %467 = vector.extract_strided_slice %461 {offsets = [0, 1], sizes = [2, 1], strides = [1, 1]} : vector<2x2xf32> to vector<2x1xf32>
    %468 = vector.broadcast %467 : vector<2x1xf32> to vector<2x2xf32>
    %469 = vector.broadcast %11 : vector<1x2xf32> to vector<2x2xf32>
    %470 = arith.mulf %468, %469 : vector<2x2xf32>
    %471 = arith.addf %466, %470 : vector<2x2xf32>
    %472 = math.tanh %471 : vector<2x2xf32>
    %473 = vector.extract_strided_slice %472 {offsets = [0, 0], sizes = [2, 1], strides = [1, 1]} : vector<2x2xf32> to vector<2x1xf32>
    %474 = vector.broadcast %473 : vector<2x1xf32> to vector<2x2xf32>
    %475 = vector.broadcast %10 : vector<1x2xf32> to vector<2x2xf32>
    %476 = arith.mulf %474, %475 : vector<2x2xf32>
    %477 = arith.addf %460, %476 : vector<2x2xf32>
    %478 = vector.extract_strided_slice %472 {offsets = [0, 1], sizes = [2, 1], strides = [1, 1]} : vector<2x2xf32> to vector<2x1xf32>
    %479 = vector.broadcast %478 : vector<2x1xf32> to vector<2x2xf32>
    %480 = vector.broadcast %11 : vector<1x2xf32> to vector<2x2xf32>
    %481 = arith.mulf %479, %480 : vector<2x2xf32>
    %482 = arith.addf %477, %481 : vector<2x2xf32>
    %483 = math.tanh %482 : vector<2x2xf32>
    %484 = vector.extract_strided_slice %483 {offsets = [0, 0], sizes = [2, 1], strides = [1, 1]} : vector<2x2xf32> to vector<2x1xf32>
    %485 = vector.broadcast %484 : vector<2x1xf32> to vector<2x2xf32>
    %486 = vector.broadcast %10 : vector<1x2xf32> to vector<2x2xf32>
    %487 = arith.mulf %485, %486 : vector<2x2xf32>
    %488 = arith.addf %460, %487 : vector<2x2xf32>
    %489 = vector.extract_strided_slice %483 {offsets = [0, 1], sizes = [2, 1], strides = [1, 1]} : vector<2x2xf32> to vector<2x1xf32>
    %490 = vector.broadcast %489 : vector<2x1xf32> to vector<2x2xf32>
    %491 = vector.broadcast %11 : vector<1x2xf32> to vector<2x2xf32>
    %492 = arith.mulf %490, %491 : vector<2x2xf32>
    %493 = arith.addf %488, %492 : vector<2x2xf32>
    %494 = math.tanh %493 : vector<2x2xf32>
    %495 = vector.extract_strided_slice %494 {offsets = [0, 0], sizes = [2, 1], strides = [1, 1]} : vector<2x2xf32> to vector<2x1xf32>
    %496 = vector.broadcast %495 : vector<2x1xf32> to vector<2x2xf32>
    %497 = vector.broadcast %10 : vector<1x2xf32> to vector<2x2xf32>
    %498 = arith.mulf %496, %497 : vector<2x2xf32>
    %499 = arith.addf %460, %498 : vector<2x2xf32>
    %500 = vector.extract_strided_slice %494 {offsets = [0, 1], sizes = [2, 1], strides = [1, 1]} : vector<2x2xf32> to vector<2x1xf32>
    %501 = vector.broadcast %500 : vector<2x1xf32> to vector<2x2xf32>
    %502 = vector.broadcast %11 : vector<1x2xf32> to vector<2x2xf32>
    %503 = arith.mulf %501, %502 : vector<2x2xf32>
    %504 = arith.addf %499, %503 : vector<2x2xf32>
    %505 = math.tanh %504 : vector<2x2xf32>
    %506 = vector.extract_strided_slice %505 {offsets = [0, 0], sizes = [2, 1], strides = [1, 1]} : vector<2x2xf32> to vector<2x1xf32>
    %507 = vector.broadcast %506 : vector<2x1xf32> to vector<2x2xf32>
    %508 = vector.broadcast %10 : vector<1x2xf32> to vector<2x2xf32>
    %509 = arith.mulf %507, %508 : vector<2x2xf32>
    %510 = arith.addf %460, %509 : vector<2x2xf32>
    %511 = vector.extract_strided_slice %505 {offsets = [0, 1], sizes = [2, 1], strides = [1, 1]} : vector<2x2xf32> to vector<2x1xf32>
    %512 = vector.broadcast %511 : vector<2x1xf32> to vector<2x2xf32>
    %513 = vector.broadcast %11 : vector<1x2xf32> to vector<2x2xf32>
    %514 = arith.mulf %512, %513 : vector<2x2xf32>
    %515 = arith.addf %510, %514 : vector<2x2xf32>
    %516 = math.tanh %515 : vector<2x2xf32>
    %517 = vector.extract_strided_slice %516 {offsets = [0, 0], sizes = [2, 1], strides = [1, 1]} : vector<2x2xf32> to vector<2x1xf32>
    %518 = vector.broadcast %517 : vector<2x1xf32> to vector<2x2xf32>
    %519 = vector.broadcast %10 : vector<1x2xf32> to vector<2x2xf32>
    %520 = arith.mulf %518, %519 : vector<2x2xf32>
    %521 = arith.addf %460, %520 : vector<2x2xf32>
    %522 = vector.extract_strided_slice %516 {offsets = [0, 1], sizes = [2, 1], strides = [1, 1]} : vector<2x2xf32> to vector<2x1xf32>
    %523 = vector.broadcast %522 : vector<2x1xf32> to vector<2x2xf32>
    %524 = vector.broadcast %11 : vector<1x2xf32> to vector<2x2xf32>
    %525 = arith.mulf %523, %524 : vector<2x2xf32>
    %526 = arith.addf %521, %525 : vector<2x2xf32>
    %527 = math.tanh %526 : vector<2x2xf32>
    %528 = vector.extract_strided_slice %527 {offsets = [0, 0], sizes = [2, 1], strides = [1, 1]} : vector<2x2xf32> to vector<2x1xf32>
    %529 = vector.broadcast %528 : vector<2x1xf32> to vector<2x2xf32>
    %530 = vector.broadcast %10 : vector<1x2xf32> to vector<2x2xf32>
    %531 = arith.mulf %529, %530 : vector<2x2xf32>
    %532 = arith.addf %460, %531 : vector<2x2xf32>
    %533 = vector.extract_strided_slice %527 {offsets = [0, 1], sizes = [2, 1], strides = [1, 1]} : vector<2x2xf32> to vector<2x1xf32>
    %534 = vector.broadcast %533 : vector<2x1xf32> to vector<2x2xf32>
    %535 = vector.broadcast %11 : vector<1x2xf32> to vector<2x2xf32>
    %536 = arith.mulf %534, %535 : vector<2x2xf32>
    %537 = arith.addf %532, %536 : vector<2x2xf32>
    %538 = math.tanh %537 : vector<2x2xf32>
    %539 = vector.extract_strided_slice %538 {offsets = [0, 0], sizes = [2, 1], strides = [1, 1]} : vector<2x2xf32> to vector<2x1xf32>
    %540 = vector.broadcast %539 : vector<2x1xf32> to vector<2x2xf32>
    %541 = vector.broadcast %10 : vector<1x2xf32> to vector<2x2xf32>
    %542 = arith.mulf %540, %541 : vector<2x2xf32>
    %543 = arith.addf %460, %542 : vector<2x2xf32>
    %544 = vector.extract_strided_slice %538 {offsets = [0, 1], sizes = [2, 1], strides = [1, 1]} : vector<2x2xf32> to vector<2x1xf32>
    %545 = vector.broadcast %544 : vector<2x1xf32> to vector<2x2xf32>
    %546 = vector.broadcast %11 : vector<1x2xf32> to vector<2x2xf32>
    %547 = arith.mulf %545, %546 : vector<2x2xf32>
    %548 = arith.addf %543, %547 : vector<2x2xf32>
    %549 = math.tanh %548 : vector<2x2xf32>
    %550 = tpu.concatenate %472, %483, %494, %505, %516, %527, %538, %549, %447 in 1 : vector<2x2xf32>, vector<2x2xf32>, vector<2x2xf32>, vector<2x2xf32>, vector<2x2xf32>, vector<2x2xf32>, vector<2x2xf32>, vector<2x2xf32>, vector<2x4xf32> -> vector<2x20xf32>
    %c0_9 = arith.constant 0 : index
    %c0_10 = arith.constant 0 : index
    %551 = vector.load %arg2[%c0_9, %c0_10] : memref<2x20xf32, #tpu.memory_space<vmem>>, vector<2x20xf32>
    tpu.vector_store %arg2[%c0_9, %c0_10], %550 {strides = array<i32>} : memref<2x20xf32, #tpu.memory_space<vmem>>, vector<2x20xf32>,
    return
  }
}

</mosaic_0001>

<llo_original>
// kernel: vae_forward.1
$region0: #{vae_forward.1}
  #allocation0 [shape = 'u32[]', space=smem, size = 0x4, offset = 0x4, fixed_abs, tag = 'smem constant byte address 0x4 - core index']
  #allocation1 [shape = 'u32[72,128]{1,0:T(1,128)}', space=vmem, size = 0x9000, scoped, tag = 'internal scratch']
  %s0 = inlined_call_operand.vmem [shape: f32[18,2], index: 0, kind: input, shape index: {}]
  %s1 = inlined_call_operand.vmem [shape: f32[40,10], index: 1, kind: input, shape index: {}]
  %s2 = inlined_call_operand.vmem [shape: f32[2,20], index: 2, kind: output, shape index: {}]
  %s3 = sld [smem:[#allocation0]]
  $region18: #{vae_forward.1} parent=0
    _
  %s5 = ssub.s32 1, %s3
  %s6 = scalar_select 0, %s5, %s3
  // Predicated region
  $region2: #{vae_forward.1} parent=0 // pred_check
    _
  $region3: #{vae_forward.1} parent=0 // pred_check_branch
    %8 = sbr.rel (0) target = $region5
  $region4: #{vae_forward.1} parent=0 // pred_region
    _
  $region5: #{vae_forward.1} parent=0 // pred_fallthru
    _
  // Predicated region
  $region6: #{vae_forward.1} parent=0 // pred_check
    _
  $region7: #{vae_forward.1} parent=0 // pred_check_branch
    %10 = sbr.rel (0) target = $region9
  $region8: #{vae_forward.1} parent=0 // pred_region
    _
  $region9: #{vae_forward.1} parent=0 // pred_fallthru
    _
  %v11 = vld [vmem:[%s1] sm:$0xff]
  %v12 = vld [vmem:[%s1 + $0x8] sm:$0xff]
  %v13 = vld [vmem:[%s1 + $0x10] sm:$0xff]
  %v14 = vld [vmem:[%s1 + $0x18] sm:$0xff]
  %v15 = vld [vmem:[%s1 + $0x20] sm:$0xff]
  %v16 = vld [vmem:[%s0] sm:$0xff]
  %v17 = vld [vmem:[%s0 + $0x8] sm:$0xff]
  %v18 = vld [vmem:[%s0 + $0x10] sm:$0x3]
  %v19 = vperm.slane %v12, 6
  %v21 = vrot.slane %v12, 2
  %vm22 = vcmask 15360
  %v24 = vsel %vm22, %v16, 0
  %v27 = vsel %vm22, %v17, 0
  %vm29 = vcmask 1041408
  %v30 = vsel %vm29, %v21, 0
  %32 = vmatpush.msra.mxu0 0.0
  %33 = vmatpush.msra.mxu0 0.0
  %34 = vmatpush.msra.mxu0 0.0
  %35 = vmatpush.msra.mxu0 0.0
  %36 = vmatpush.msra.mxu0 0.0
  %37 = vmatpush.msra.mxu0 0.0
  %38 = vmatpush.msra.mxu0 0.0
  %39 = vmatpush.msra.mxu0 0.0
  %40 = vmatpush.msra.mxu0 0.0
  %41 = vmatpush.msra.mxu0 0.0
  %42 = vmatpush.msra.mxu0 0.0
  %43 = vmatpush.msra.mxu0 0.0
  %44 = vmatpush.msra.mxu0 0.0
  %45 = vmatpush.msra.mxu0 0.0
  %46 = vmatpush.msra.mxu0 0.0
  %47 = vmatpush.msra.mxu0 %v30
  %48 = vmatmul.f32.gmra.mxu0 %v24
  %v49 = vpop.f32.mrf.mxu0
  %v50 = vadd.f32 %v19, %v49
  %51 = vmatmul.f32.gmra.mxu0 %v27
  %v52 = vpop.f32.mrf.mxu0
  %v53 = vadd.f32 %v19, %v52
  %54 = vdwg.mxu0
  %v55 = vperm.slane %v11, 0
  %v56 = vmul.f32 %v55, 0.0
  %v57 = vadd.f32 %v50, %v56
  %v58 = vperm.slane %v11, 1
  %v59 = vmul.f32 %v58, 0.0
  %v60 = vadd.f32 %v57, %v59
  %v61 = vperm.slane %v11, 2
  %v62 = vmul.f32 %v61, 0.0
  %v63 = vadd.f32 %v60, %v62
  %v64 = vperm.slane %v11, 3
  %v65 = vmul.f32 %v64, 0.0
  %v66 = vadd.f32 %v63, %v65
  %v67 = vperm.slane %v11, 4
  %v68 = vmul.f32 %v67, 0.0
  %v69 = vadd.f32 %v66, %v68
  %v70 = vperm.slane %v11, 5
  %v71 = vmul.f32 %v70, 0.0
  %v72 = vadd.f32 %v69, %v71
  %v73 = vperm.slane %v11, 6
  %v74 = vmul.f32 %v73, 0.0
  %v75 = vadd.f32 %v72, %v74
  %v76 = vperm.slane %v11, 7
  %v77 = vmul.f32 %v76, 0.0
  %v78 = vadd.f32 %v75, %v77
  %v79 = vperm.slane %v12, 0
  %v80 = vmul.f32 %v79, 0.0
  %v81 = vadd.f32 %v78, %v80
  %v82 = vperm.slane %v12, 1
  %v83 = vmul.f32 %v82, 0.0
  %v84 = vadd.f32 %v81, %v83
  %v85 = vtanh.pop %v84
  %87 = vset.pattern.permute.xlu0 0
  %88 = vperm.xlu0 %87, %v85
  %v89 = vpop.permute.xlu0 %88
  %v91 = vmul.f32 %v89, %v55
  %v93 = vrot.slane %v91, 6
  %v95 = vadd.f32 %v50, %v93
  %96 = vset.pattern.permute.xlu0 1
  %97 = vperm.xlu0 %96, %v85
  %v98 = vpop.permute.xlu0 %97
  %v100 = vmul.f32 %v98, %v58
  %v102 = vrot.slane %v100, 6
  %v104 = vadd.f32 %v95, %v102
  %105 = vset.pattern.permute.xlu0 2
  %106 = vperm.xlu0 %105, %v85
  %v107 = vpop.permute.xlu0 %106
  %v109 = vmul.f32 %v107, %v61
  %v111 = vrot.slane %v109, 6
  %v113 = vadd.f32 %v104, %v111
  %114 = vset.pattern.permute.xlu0 3
  %115 = vperm.xlu0 %114, %v85
  %v116 = vpop.permute.xlu0 %115
  %v118 = vmul.f32 %v116, %v64
  %v120 = vrot.slane %v118, 6
  %v122 = vadd.f32 %v113, %v120
  %123 = vset.pattern.permute.xlu0 4
  %124 = vperm.xlu0 %123, %v85
  %v125 = vpop.permute.xlu0 %124
  %v127 = vmul.f32 %v125, %v67
  %v129 = vrot.slane %v127, 6
  %v131 = vadd.f32 %v122, %v129
  %132 = vset.pattern.permute.xlu0 5
  %133 = vperm.xlu0 %132, %v85
  %v134 = vpop.permute.xlu0 %133
  %v136 = vmul.f32 %v134, %v70
  %v138 = vrot.slane %v136, 6
  %v140 = vadd.f32 %v131, %v138
  %141 = vset.pattern.permute.xlu0 6
  %142 = vperm.xlu0 %141, %v85
  %v143 = vpop.permute.xlu0 %142
  %v145 = vmul.f32 %v143, %v73
  %v147 = vrot.slane %v145, 6
  %v149 = vadd.f32 %v140, %v147
  %150 = vset.pattern.permute.xlu0 7
  %151 = vperm.xlu0 %150, %v85
  %v152 = vpop.permute.xlu0 %151
  %v154 = vmul.f32 %v152, %v76
  %v156 = vrot.slane %v154, 6
  %v158 = vadd.f32 %v149, %v156
  %159 = vset.pattern.permute.xlu0 8
  %160 = vperm.xlu0 %159, %v85
  %v161 = vpop.permute.xlu0 %160
  %v163 = vmul.f32 %v161, %v79
  %v165 = vrot.slane %v163, 6
  %v167 = vadd.f32 %v158, %v165
  %168 = vset.pattern.permute.xlu0 9
  %169 = vperm.xlu0 %168, %v85
  %v170 = vpop.permute.xlu0 %169
  %v172 = vmul.f32 %v170, %v82
  %v174 = vrot.slane %v172, 6
  %v176 = vadd.f32 %v167, %v174
  %v177 = vtanh.pop %v176
  %179 = vset.pattern.permute.xlu0 0
  %180 = vperm.xlu0 %179, %v177
  %v181 = vpop.permute.xlu0 %180
  %v183 = vmul.f32 %v181, %v55
  %v185 = vrot.slane %v183, 6
  %v187 = vadd.f32 %v50, %v185
  %188 = vset.pattern.permute.xlu0 1
  %189 = vperm.xlu0 %188, %v177
  %v190 = vpop.permute.xlu0 %189
  %v192 = vmul.f32 %v190, %v58
  %v194 = vrot.slane %v192, 6
  %v196 = vadd.f32 %v187, %v194
  %197 = vset.pattern.permute.xlu0 2
  %198 = vperm.xlu0 %197, %v177
  %v199 = vpop.permute.xlu0 %198
  %v201 = vmul.f32 %v199, %v61
  %v203 = vrot.slane %v201, 6
  %v205 = vadd.f32 %v196, %v203
  %206 = vset.pattern.permute.xlu0 3
  %207 = vperm.xlu0 %206, %v177
  %v208 = vpop.permute.xlu0 %207
  %v210 = vmul.f32 %v208, %v64
  %v212 = vrot.slane %v210, 6
  %v214 = vadd.f32 %v205, %v212
  %215 = vset.pattern.permute.xlu0 4
  %216 = vperm.xlu0 %215, %v177
  %v217 = vpop.permute.xlu0 %216
  %v219 = vmul.f32 %v217, %v67
  %v221 = vrot.slane %v219, 6
  %v223 = vadd.f32 %v214, %v221
  %224 = vset.pattern.permute.xlu0 5
  %225 = vperm.xlu0 %224, %v177
  %v226 = vpop.permute.xlu0 %225
  %v228 = vmul.f32 %v226, %v70
  %v230 = vrot.slane %v228, 6
  %v232 = vadd.f32 %v223, %v230
  %233 = vset.pattern.permute.xlu0 6
  %234 = vperm.xlu0 %233, %v177
  %v235 = vpop.permute.xlu0 %234
  %v237 = vmul.f32 %v235, %v73
  %v239 = vrot.slane %v237, 6
  %v241 = vadd.f32 %v232, %v239
  %242 = vset.pattern.permute.xlu0 7
  %243 = vperm.xlu0 %242, %v177
  %v244 = vpop.permute.xlu0 %243
  %v246 = vmul.f32 %v244, %v76
  %v248 = vrot.slane %v246, 6
  %v250 = vadd.f32 %v241, %v248
  %251 = vset.pattern.permute.xlu0 8
  %252 = vperm.xlu0 %251, %v177
  %v253 = vpop.permute.xlu0 %252
  %v255 = vmul.f32 %v253, %v79
  %v257 = vrot.slane %v255, 6
  %v259 = vadd.f32 %v250, %v257
  %260 = vset.pattern.permute.xlu0 9
  %261 = vperm.xlu0 %260, %v177
  %v262 = vpop.permute.xlu0 %261
  %v264 = vmul.f32 %v262, %v82
  %v266 = vrot.slane %v264, 6
  %v268 = vadd.f32 %v259, %v266
  %v269 = vtanh.pop %v268
  %271 = vset.pattern.permute.xlu0 0
  %272 = vperm.xlu0 %271, %v269
  %v273 = vpop.permute.xlu0 %272
  %v275 = vmul.f32 %v273, %v55
  %v277 = vrot.slane %v275, 6
  %v279 = vadd.f32 %v50, %v277
  %280 = vset.pattern.permute.xlu0 1
  %281 = vperm.xlu0 %280, %v269
  %v282 = vpop.permute.xlu0 %281
  %v284 = vmul.f32 %v282, %v58
  %v286 = vrot.slane %v284, 6
  %v288 = vadd.f32 %v279, %v286
  %289 = vset.pattern.permute.xlu0 2
  %290 = vperm.xlu0 %289, %v269
  %v291 = vpop.permute.xlu0 %290
  %v293 = vmul.f32 %v291, %v61
  %v295 = vrot.slane %v293, 6
  %v297 = vadd.f32 %v288, %v295
  %298 = vset.pattern.permute.xlu0 3
  %299 = vperm.xlu0 %298, %v269
  %v300 = vpop.permute.xlu0 %299
  %v302 = vmul.f32 %v300, %v64
  %v304 = vrot.slane %v302, 6
  %v306 = vadd.f32 %v297, %v304
  %307 = vset.pattern.permute.xlu0 4
  %308 = vperm.xlu0 %307, %v269
  %v309 = vpop.permute.xlu0 %308
  %v311 = vmul.f32 %v309, %v67
  %v313 = vrot.slane %v311, 6
  %v315 = vadd.f32 %v306, %v313
  %316 = vset.pattern.permute.xlu0 5
  %317 = vperm.xlu0 %316, %v269
  %v318 = vpop.permute.xlu0 %317
  %v320 = vmul.f32 %v318, %v70
  %v322 = vrot.slane %v320, 6
  %v324 = vadd.f32 %v315, %v322
  %325 = vset.pattern.permute.xlu0 6
  %326 = vperm.xlu0 %325, %v269
  %v327 = vpop.permute.xlu0 %326
  %v329 = vmul.f32 %v327, %v73
  %v331 = vrot.slane %v329, 6
  %v333 = vadd.f32 %v324, %v331
  %334 = vset.pattern.permute.xlu0 7
  %335 = vperm.xlu0 %334, %v269
  %v336 = vpop.permute.xlu0 %335
  %v338 = vmul.f32 %v336, %v76
  %v340 = vrot.slane %v338, 6
  %v342 = vadd.f32 %v333, %v340
  %343 = vset.pattern.permute.xlu0 8
  %344 = vperm.xlu0 %343, %v269
  %v345 = vpop.permute.xlu0 %344
  %v347 = vmul.f32 %v345, %v79
  %v349 = vrot.slane %v347, 6
  %v351 = vadd.f32 %v342, %v349
  %352 = vset.pattern.permute.xlu0 9
  %353 = vperm.xlu0 %352, %v269
  %v354 = vpop.permute.xlu0 %353
  %v356 = vmul.f32 %v354, %v82
  %v358 = vrot.slane %v356, 6
  %v360 = vadd.f32 %v351, %v358
  %v361 = vtanh.pop %v360
  %363 = vset.pattern.permute.xlu0 0
  %364 = vperm.xlu0 %363, %v361
  %v365 = vpop.permute.xlu0 %364
  %v367 = vmul.f32 %v365, %v55
  %v369 = vrot.slane %v367, 6
  %v371 = vadd.f32 %v53, %v369
  %372 = vset.pattern.permute.xlu0 1
  %373 = vperm.xlu0 %372, %v361
  %v374 = vpop.permute.xlu0 %373
  %v376 = vmul.f32 %v374, %v58
  %v378 = vrot.slane %v376, 6
  %v380 = vadd.f32 %v371, %v378
  %381 = vset.pattern.permute.xlu0 2
  %382 = vperm.xlu0 %381, %v361
  %v383 = vpop.permute.xlu0 %382
  %v385 = vmul.f32 %v383, %v61
  %v387 = vrot.slane %v385, 6
  %v389 = vadd.f32 %v380, %v387
  %390 = vset.pattern.permute.xlu0 3
  %391 = vperm.xlu0 %390, %v361
  %v392 = vpop.permute.xlu0 %391
  %v394 = vmul.f32 %v392, %v64
  %v396 = vrot.slane %v394, 6
  %v398 = vadd.f32 %v389, %v396
  %399 = vset.pattern.permute.xlu0 4
  %400 = vperm.xlu0 %399, %v361
  %v401 = vpop.permute.xlu0 %400
  %v403 = vmul.f32 %v401, %v67
  %v405 = vrot.slane %v403, 6
  %v407 = vadd.f32 %v398, %v405
  %408 = vset.pattern.permute.xlu0 5
  %409 = vperm.xlu0 %408, %v361
  %v410 = vpop.permute.xlu0 %409
  %v412 = vmul.f32 %v410, %v70
  %v414 = vrot.slane %v412, 6
  %v416 = vadd.f32 %v407, %v414
  %417 = vset.pattern.permute.xlu0 6
  %418 = vperm.xlu0 %417, %v361
  %v419 = vpop.permute.xlu0 %418
  %v421 = vmul.f32 %v419, %v73
  %v423 = vrot.slane %v421, 6
  %v425 = vadd.f32 %v416, %v423
  %426 = vset.pattern.permute.xlu0 7
  %427 = vperm.xlu0 %426, %v361
  %v428 = vpop.permute.xlu0 %427
  %v430 = vmul.f32 %v428, %v76
  %v432 = vrot.slane %v430, 6
  %v434 = vadd.f32 %v425, %v432
  %435 = vset.pattern.permute.xlu0 8
  %436 = vperm.xlu0 %435, %v361
  %v437 = vpop.permute.xlu0 %436
  %v439 = vmul.f32 %v437, %v79
  %v441 = vrot.slane %v439, 6
  %v443 = vadd.f32 %v434, %v441
  %444 = vset.pattern.permute.xlu0 9
  %445 = vperm.xlu0 %444, %v361
  %v446 = vpop.permute.xlu0 %445
  %v448 = vmul.f32 %v446, %v82
  %v450 = vrot.slane %v448, 6
  %v452 = vadd.f32 %v443, %v450
  %v453 = vtanh.pop %v452
  %455 = vset.pattern.permute.xlu0 0
  %456 = vperm.xlu0 %455, %v453
  %v457 = vpop.permute.xlu0 %456
  %v459 = vmul.f32 %v457, %v55
  %v461 = vrot.slane %v459, 6
  %v463 = vadd.f32 %v53, %v461
  %464 = vset.pattern.permute.xlu0 1
  %465 = vperm.xlu0 %464, %v453
  %v466 = vpop.permute.xlu0 %465
  %v468 = vmul.f32 %v466, %v58
  %v470 = vrot.slane %v468, 6
  %v472 = vadd.f32 %v463, %v470
  %473 = vset.pattern.permute.xlu0 2
  %474 = vperm.xlu0 %473, %v453
  %v475 = vpop.permute.xlu0 %474
  %v477 = vmul.f32 %v475, %v61
  %v479 = vrot.slane %v477, 6
  %v481 = vadd.f32 %v472, %v479
  %482 = vset.pattern.permute.xlu0 3
  %483 = vperm.xlu0 %482, %v453
  %v484 = vpop.permute.xlu0 %483
  %v486 = vmul.f32 %v484, %v64
  %v488 = vrot.slane %v486, 6
  %v490 = vadd.f32 %v481, %v488
  %491 = vset.pattern.permute.xlu0 4
  %492 = vperm.xlu0 %491, %v453
  %v493 = vpop.permute.xlu0 %492
  %v495 = vmul.f32 %v493, %v67
  %v497 = vrot.slane %v495, 6
  %v499 = vadd.f32 %v490, %v497
  %500 = vset.pattern.permute.xlu0 5
  %501 = vperm.xlu0 %500, %v453
  %v502 = vpop.permute.xlu0 %501
  %v504 = vmul.f32 %v502, %v70
  %v506 = vrot.slane %v504, 6
  %v508 = vadd.f32 %v499, %v506
  %509 = vset.pattern.permute.xlu0 6
  %510 = vperm.xlu0 %509, %v453
  %v511 = vpop.permute.xlu0 %510
  %v513 = vmul.f32 %v511, %v73
  %v515 = vrot.slane %v513, 6
  %v517 = vadd.f32 %v508, %v515
  %518 = vset.pattern.permute.xlu0 7
  %519 = vperm.xlu0 %518, %v453
  %v520 = vpop.permute.xlu0 %519
  %v522 = vmul.f32 %v520, %v76
  %v524 = vrot.slane %v522, 6
  %v526 = vadd.f32 %v517, %v524
  %527 = vset.pattern.permute.xlu0 8
  %528 = vperm.xlu0 %527, %v453
  %v529 = vpop.permute.xlu0 %528
  %v531 = vmul.f32 %v529, %v79
  %v533 = vrot.slane %v531, 6
  %v535 = vadd.f32 %v526, %v533
  %536 = vset.pattern.permute.xlu0 9
  %537 = vperm.xlu0 %536, %v453
  %v538 = vpop.permute.xlu0 %537
  %v540 = vmul.f32 %v538, %v82
  %v542 = vrot.slane %v540, 6
  %v544 = vadd.f32 %v535, %v542
  %v545 = vtanh.pop %v544
  %547 = vset.pattern.permute.xlu0 0
  %548 = vperm.xlu0 %547, %v545
  %v549 = vpop.permute.xlu0 %548
  %v551 = vmul.f32 %v549, %v55
  %v553 = vrot.slane %v551, 6
  %v555 = vadd.f32 %v53, %v553
  %556 = vset.pattern.permute.xlu0 1
  %557 = vperm.xlu0 %556, %v545
  %v558 = vpop.permute.xlu0 %557
  %v560 = vmul.f32 %v558, %v58
  %v562 = vrot.slane %v560, 6
  %v564 = vadd.f32 %v555, %v562
  %565 = vset.pattern.permute.xlu0 2
  %566 = vperm.xlu0 %565, %v545
  %v567 = vpop.permute.xlu0 %566
  %v569 = vmul.f32 %v567, %v61
  %v571 = vrot.slane %v569, 6
  %v573 = vadd.f32 %v564, %v571
  %574 = vset.pattern.permute.xlu0 3
  %575 = vperm.xlu0 %574, %v545
  %v576 = vpop.permute.xlu0 %575
  %v578 = vmul.f32 %v576, %v64
  %v580 = vrot.slane %v578, 6
  %v582 = vadd.f32 %v573, %v580
  %583 = vset.pattern.permute.xlu0 4
  %584 = vperm.xlu0 %583, %v545
  %v585 = vpop.permute.xlu0 %584
  %v587 = vmul.f32 %v585, %v67
  %v589 = vrot.slane %v587, 6
  %v591 = vadd.f32 %v582, %v589
  %592 = vset.pattern.permute.xlu0 5
  %593 = vperm.xlu0 %592, %v545
  %v594 = vpop.permute.xlu0 %593
  %v596 = vmul.f32 %v594, %v70
  %v598 = vrot.slane %v596, 6
  %v600 = vadd.f32 %v591, %v598
  %601 = vset.pattern.permute.xlu0 6
  %602 = vperm.xlu0 %601, %v545
  %v603 = vpop.permute.xlu0 %602
  %v605 = vmul.f32 %v603, %v73
  %v607 = vrot.slane %v605, 6
  %v609 = vadd.f32 %v600, %v607
  %610 = vset.pattern.permute.xlu0 7
  %611 = vperm.xlu0 %610, %v545
  %v612 = vpop.permute.xlu0 %611
  %v614 = vmul.f32 %v612, %v76
  %v616 = vrot.slane %v614, 6
  %v618 = vadd.f32 %v609, %v616
  %619 = vset.pattern.permute.xlu0 8
  %620 = vperm.xlu0 %619, %v545
  %v621 = vpop.permute.xlu0 %620
  %v623 = vmul.f32 %v621, %v79
  %v625 = vrot.slane %v623, 6
  %v627 = vadd.f32 %v618, %v625
  %628 = vset.pattern.permute.xlu0 9
  %629 = vperm.xlu0 %628, %v545
  %v630 = vpop.permute.xlu0 %629
  %v632 = vmul.f32 %v630, %v82
  %v634 = vrot.slane %v632, 6
  %v636 = vadd.f32 %v627, %v634
  %v637 = vtanh.pop %v636
  %639 = vset.pattern.permute.xlu0 0
  %640 = vperm.xlu0 %639, %v637
  %v641 = vpop.permute.xlu0 %640
  %v643 = vmul.f32 %v641, %v55
  %v645 = vrot.slane %v643, 6
  %v647 = vadd.f32 %v53, %v645
  %648 = vset.pattern.permute.xlu0 1
  %649 = vperm.xlu0 %648, %v637
  %v650 = vpop.permute.xlu0 %649
  %v652 = vmul.f32 %v650, %v58
  %v654 = vrot.slane %v652, 6
  %v656 = vadd.f32 %v647, %v654
  %657 = vset.pattern.permute.xlu0 2
  %658 = vperm.xlu0 %657, %v637
  %v659 = vpop.permute.xlu0 %658
  %v661 = vmul.f32 %v659, %v61
  %v663 = vrot.slane %v661, 6
  %v665 = vadd.f32 %v656, %v663
  %666 = vset.pattern.permute.xlu0 3
  %667 = vperm.xlu0 %666, %v637
  %v668 = vpop.permute.xlu0 %667
  %v670 = vmul.f32 %v668, %v64
  %v672 = vrot.slane %v670, 6
  %v674 = vadd.f32 %v665, %v672
  %675 = vset.pattern.permute.xlu0 4
  %676 = vperm.xlu0 %675, %v637
  %v677 = vpop.permute.xlu0 %676
  %v679 = vmul.f32 %v677, %v67
  %v681 = vrot.slane %v679, 6
  %v683 = vadd.f32 %v674, %v681
  %684 = vset.pattern.permute.xlu0 5
  %685 = vperm.xlu0 %684, %v637
  %v686 = vpop.permute.xlu0 %685
  %v688 = vmul.f32 %v686, %v70
  %v690 = vrot.slane %v688, 6
  %v692 = vadd.f32 %v683, %v690
  %693 = vset.pattern.permute.xlu0 6
  %694 = vperm.xlu0 %693, %v637
  %v695 = vpop.permute.xlu0 %694
  %v697 = vmul.f32 %v695, %v73
  %v699 = vrot.slane %v697, 6
  %v701 = vadd.f32 %v692, %v699
  %702 = vset.pattern.permute.xlu0 7
  %703 = vperm.xlu0 %702, %v637
  %v704 = vpop.permute.xlu0 %703
  %v706 = vmul.f32 %v704, %v76
  %v708 = vrot.slane %v706, 6
  %v710 = vadd.f32 %v701, %v708
  %711 = vset.pattern.permute.xlu0 8
  %712 = vperm.xlu0 %711, %v637
  %v713 = vpop.permute.xlu0 %712
  %v715 = vmul.f32 %v713, %v79
  %v717 = vrot.slane %v715, 6
  %v719 = vadd.f32 %v710, %v717
  %720 = vset.pattern.permute.xlu0 9
  %721 = vperm.xlu0 %720, %v637
  %v722 = vpop.permute.xlu0 %721
  %v724 = vmul.f32 %v722, %v82
  %v726 = vrot.slane %v724, 6
  %v728 = vadd.f32 %v719, %v726
  %v729 = vtanh.pop %v728
  %v730 = vperm.slane %v14, 2
  %v732 = vrot.slane %v729, 6
  %vm733 = vcmask 80896
  %v734 = vsel %vm733, %v732, 0
  %v737 = vsel %vm29, %v14, 0
  %739 = vmatpush.msra.mxu0 0.0
  %740 = vmatpush.msra.mxu0 0.0
  %741 = vmatpush.msra.mxu0 0.0
  %742 = vmatpush.msra.mxu0 0.0
  %743 = vmatpush.msra.mxu0 0.0
  %744 = vmatpush.msra.mxu0 0.0
  %745 = vmatpush.msra.mxu0 0.0
  %746 = vmatpush.msra.mxu0 0.0
  %747 = vmatpush.msra.mxu0 0.0
  %748 = vmatpush.msra.mxu0 0.0
  %749 = vmatpush.msra.mxu0 0.0
  %750 = vmatpush.msra.mxu0 0.0
  %751 = vmatpush.msra.mxu0 0.0
  %752 = vmatpush.msra.mxu0 0.0
  %753 = vmatpush.msra.mxu0 %v737
  %754 = vmatpush.msra.mxu0 %v13
  %755 = vmatmul.f32.gmra.mxu0 %v734
  %v756 = vpop.f32.mrf.mxu0
  %v757 = vadd.f32 %v730, %v756
  %758 = vdwg.mxu0
  %v759 = vmul.f32 %v757, 0.5
  %v760 = vmul.f32 %v759, 1.442695
  %v761 = vpow.pop %v760
  %763 = vrot.lane.b32.xlu0 %v761, 126
  %v764 = vpop.permute.xlu0 %763
  %v766 = vmul.f32 %v18, %v764
  %v767 = vadd.f32 %v757, %v766
  %v768 = vperm.slane %v12, 7
  %v769 = vrot.slane %v12, 4
  %v771 = vsel %vm22, %v767, 0
  %v773 = vsel %vm29, %v769, 0
  %775 = vmatpush.msra.mxu0 0.0
  %776 = vmatpush.msra.mxu0 0.0
  %777 = vmatpush.msra.mxu0 0.0
  %778 = vmatpush.msra.mxu0 0.0
  %779 = vmatpush.msra.mxu0 0.0
  %780 = vmatpush.msra.mxu0 0.0
  %781 = vmatpush.msra.mxu0 0.0
  %782 = vmatpush.msra.mxu0 0.0
  %783 = vmatpush.msra.mxu0 0.0
  %784 = vmatpush.msra.mxu0 0.0
  %785 = vmatpush.msra.mxu0 0.0
  %786 = vmatpush.msra.mxu0 0.0
  %787 = vmatpush.msra.mxu0 0.0
  %788 = vmatpush.msra.mxu0 0.0
  %789 = vmatpush.msra.mxu0 0.0
  %790 = vmatpush.msra.mxu0 %v773
  %791 = vmatmul.f32.gmra.mxu0 %v771
  %v792 = vpop.f32.mrf.mxu0
  %v793 = vadd.f32 %v768, %v792
  %794 = vdwg.mxu0
  %v795 = vperm.slane %v15, 5
  %vm797 = vcmask 1044480
  %v798 = vrot.slane %v14, 3
  %v799 = vrot.slane %v15, 3
  %v800 = vsel %vm797, %v798, %v799
  %v803 = vsel %vm733, %v793, 0
  %v805 = vsel %vm29, %v799, 0
  %807 = vmatpush.msra.mxu0 0.0
  %808 = vmatpush.msra.mxu0 0.0
  %809 = vmatpush.msra.mxu0 0.0
  %810 = vmatpush.msra.mxu0 0.0
  %811 = vmatpush.msra.mxu0 0.0
  %812 = vmatpush.msra.mxu0 0.0
  %813 = vmatpush.msra.mxu0 0.0
  %814 = vmatpush.msra.mxu0 0.0
  %815 = vmatpush.msra.mxu0 0.0
  %816 = vmatpush.msra.mxu0 0.0
  %817 = vmatpush.msra.mxu0 0.0
  %818 = vmatpush.msra.mxu0 0.0
  %819 = vmatpush.msra.mxu0 0.0
  %820 = vmatpush.msra.mxu0 0.0
  %821 = vmatpush.msra.mxu0 %v805
  %822 = vmatpush.msra.mxu0 %v800
  %823 = vmatmul.f32.gmra.mxu0 %v803
  %v824 = vpop.f32.mrf.mxu0
  %v825 = vadd.f32 %v795, %v824
  %826 = vdwg.mxu0
  %v827 = vperm.slane %v15, 6
  %v828 = vmul.f32 %v827, 0.0
  %v829 = vadd.f32 %v825, %v828
  %v830 = vperm.slane %v15, 7
  %v831 = vmul.f32 %v830, 0.0
  %v832 = vadd.f32 %v829, %v831
  %v833 = vtanh.pop %v832
  %835 = vset.pattern.permute.xlu0 0
  %836 = vperm.xlu0 %835, %v833
  %v837 = vpop.permute.xlu0 %836
  %v839 = vmul.f32 %v837, %v827
  %v840 = vadd.f32 %v825, %v839
  %841 = vset.pattern.permute.xlu0 1
  %842 = vperm.xlu0 %841, %v833
  %v843 = vpop.permute.xlu0 %842
  %v845 = vmul.f32 %v843, %v830
  %v846 = vadd.f32 %v840, %v845
  %v847 = vtanh.pop %v846
  %849 = vset.pattern.permute.xlu0 0
  %850 = vperm.xlu0 %849, %v847
  %v851 = vpop.permute.xlu0 %850
  %v853 = vmul.f32 %v851, %v827
  %v854 = vadd.f32 %v825, %v853
  %855 = vset.pattern.permute.xlu0 1
  %856 = vperm.xlu0 %855, %v847
  %v857 = vpop.permute.xlu0 %856
  %v859 = vmul.f32 %v857, %v830
  %v860 = vadd.f32 %v854, %v859
  %v861 = vtanh.pop %v860
  %863 = vset.pattern.permute.xlu0 0
  %864 = vperm.xlu0 %863, %v861
  %v865 = vpop.permute.xlu0 %864
  %v867 = vmul.f32 %v865, %v827
  %v868 = vadd.f32 %v825, %v867
  %869 = vset.pattern.permute.xlu0 1
  %870 = vperm.xlu0 %869, %v861
  %v871 = vpop.permute.xlu0 %870
  %v873 = vmul.f32 %v871, %v830
  %v874 = vadd.f32 %v868, %v873
  %v875 = vtanh.pop %v874
  %877 = vset.pattern.permute.xlu0 0
  %878 = vperm.xlu0 %877, %v875
  %v879 = vpop.permute.xlu0 %878
  %v881 = vmul.f32 %v879, %v827
  %v882 = vadd.f32 %v825, %v881
  %883 = vset.pattern.permute.xlu0 1
  %884 = vperm.xlu0 %883, %v875
  %v885 = vpop.permute.xlu0 %884
  %v887 = vmul.f32 %v885, %v830
  %v888 = vadd.f32 %v882, %v887
  %v889 = vtanh.pop %v888
  %891 = vset.pattern.permute.xlu0 0
  %892 = vperm.xlu0 %891, %v889
  %v893 = vpop.permute.xlu0 %892
  %v895 = vmul.f32 %v893, %v827
  %v896 = vadd.f32 %v825, %v895
  %897 = vset.pattern.permute.xlu0 1
  %898 = vperm.xlu0 %897, %v889
  %v899 = vpop.permute.xlu0 %898
  %v901 = vmul.f32 %v899, %v830
  %v902 = vadd.f32 %v896, %v901
  %v903 = vtanh.pop %v902
  %905 = vset.pattern.permute.xlu0 0
  %906 = vperm.xlu0 %905, %v903
  %v907 = vpop.permute.xlu0 %906
  %v909 = vmul.f32 %v907, %v827
  %v910 = vadd.f32 %v825, %v909
  %911 = vset.pattern.permute.xlu0 1
  %912 = vperm.xlu0 %911, %v903
  %v913 = vpop.permute.xlu0 %912
  %v915 = vmul.f32 %v913, %v830
  %v916 = vadd.f32 %v910, %v915
  %v917 = vtanh.pop %v916
  %919 = vset.pattern.permute.xlu0 0
  %920 = vperm.xlu0 %919, %v917
  %v921 = vpop.permute.xlu0 %920
  %v923 = vmul.f32 %v921, %v827
  %v924 = vadd.f32 %v825, %v923
  %925 = vset.pattern.permute.xlu0 1
  %926 = vperm.xlu0 %925, %v917
  %v927 = vpop.permute.xlu0 %926
  %v929 = vmul.f32 %v927, %v830
  %v930 = vadd.f32 %v924, %v929
  %v931 = vtanh.pop %v930
  %932 = vrot.lane.b32.xlu0 %v847, 2
  %v933 = vpop.permute.xlu0 %932
  %935 = vrot.lane.b32.xlu0 %v861, 4
  %v936 = vpop.permute.xlu0 %935
  %938 = vrot.lane.b32.xlu0 %v875, 6
  %v939 = vpop.permute.xlu0 %938
  %941 = vrot.lane.b32.xlu0 %v889, 8
  %v942 = vpop.permute.xlu0 %941
  %944 = vrot.lane.b32.xlu0 %v903, 10
  %v945 = vpop.permute.xlu0 %944
  %947 = vrot.lane.b32.xlu0 %v917, 12
  %v948 = vpop.permute.xlu0 %947
  %951 = vrot.lane.b32.xlu0 %v931, 14
  %v952 = vpop.permute.xlu0 %951
  %955 = vrot.lane.b32.xlu0 %v757, 16
  %v956 = vpop.permute.xlu0 %955
  %v958 = vsel %vm22, %v833, %v933
  %vm959 = vcmask 31744
  %v960 = vsel %vm959, %v958, %v936
  %vm961 = vcmask 48128
  %v962 = vsel %vm961, %v960, %v939
  %vm963 = vcmask 64512
  %v964 = vsel %vm963, %v962, %v942
  %v965 = vsel %vm733, %v964, %v945
  %vm966 = vcmask 97280
  %v967 = vsel %vm966, %v965, %v948
  %vm968 = vcmask 113664
  %v969 = vsel %vm968, %v967, %v952
  %vm970 = vcmask 130048
  %v971 = vsel %vm970, %v969, %v956
  %vm972 = vcmask 156672
  %973 = vst.msk [vmem:[%s2] sm:$0x3] %vm972, %v971
  // Predicated region
  $region10: #{vae_forward.1} parent=0 // pred_check
    _
  $region11: #{vae_forward.1} parent=0 // pred_check_branch
    %975 = sbr.rel (0) target = $region13
  $region12: #{vae_forward.1} parent=0 // pred_region
    _
  $region13: #{vae_forward.1} parent=0 // pred_fallthru
    _
  // Predicated region
  $region14: #{vae_forward.1} parent=0 // pred_check
    _
  $region15: #{vae_forward.1} parent=0 // pred_check_branch
    %977 = sbr.rel (0) target = $region17
  $region16: #{vae_forward.1} parent=0 // pred_region
    _
  $region17: #{vae_forward.1} parent=0 // pred_fallthru
    _

</llo_original>
